<compile_context>
chip_gen: v5e
topology: v5e:2x2
jax: 0.10.0
libtpu: 0.0.40
codegen_flags: <defaults>
</compile_context>

<pallas_src>
import functools
import numpy as np

import jax
import jax.numpy as jnp
from jax.experimental import pallas as pl
from jax.experimental.pallas import tpu as pltpu


# ----------------------------------------------------------------------------- kernel ----
def _fused_xattn_kernel(h_ref, rf_ref,
                        w_kv_ref, b_kv_ref, wq_ref, bq_ref,
                        a_h_ref, a_a_ref, b_eff_ref,
                        out_ref, *, n_heads, tile_b, lq, lkv):
    """One (core, batch-tile) step of CrossAttentionCore (fusion_type='xattn_cat').

    Grid = (core, batch_tile); core 0 = pocket, core 1 = ligand. Weight matrices are
    pre-transposed [in, out]; host-side folds:
      * 1/sqrt(hd) attention scale folded into wq/bq,
      * linear_query folded into K/V:  [K|V] = rf @ W_kv + b_kv  (one K=Dr matmul),
      * attention out-proj folded into linear_cat:
            out = h @ A_h + sum_h attn_h @ A_a[h-block] + b_eff.
    Padded query rows are zeros; their outputs are dropped by the host-side gather.
    """
    D = out_ref.shape[-1]
    hd = D // n_heads

    h2d = h_ref[0]                    # (TB*Lq, D)   bf16
    rf2d = rf_ref[0]                  # (TB*Lkv, Dr) bf16

    # --- fused projections (single K=Dr matmul for K|V; q scale folded into weights) ---
    kvp = jnp.dot(rf2d, w_kv_ref[0], preferred_element_type=jnp.float32) + b_kv_ref[0]
    q2d = jnp.dot(h2d, wq_ref[0], preferred_element_type=jnp.float32) + bq_ref[0]

    q3 = q2d.astype(jnp.bfloat16).reshape(tile_b, lq, D)
    k3 = kvp[:, :D].astype(jnp.bfloat16).reshape(tile_b, lkv, D)
    v3 = kvp[:, D:].astype(jnp.bfloat16).reshape(tile_b, lkv, D)

    # out = h @ A_h + b_eff ; per-head attention contributions accumulated below.
    out = jnp.dot(h2d, a_h_ref[0], preferred_element_type=jnp.float32) + b_eff_ref[0]

    a_a = a_a_ref[0]                  # (D, D) f32, head blocks on rows (8-row aligned)

    # Heads are a short static unroll (hd << 128 lanes, relayout-free); score / PV
    # matmuls are batched over the batch-tile dim; softmax math stays f32.
    for hi in range(n_heads):
        sl = slice(hi * hd, (hi + 1) * hd)
        s = jnp.einsum('bqd,bkd->bqk', q3[:, :, sl], k3[:, :, sl],
                       preferred_element_type=jnp.float32)          # (TB, Lq, Lkv)
        s = s - jnp.max(s, axis=-1, keepdims=True)
        p = jnp.exp(s)
        p = p * pl.reciprocal(jnp.sum(p, axis=-1, keepdims=True), approx=True)
        o = jnp.einsum('bqk,bkd->bqd', p.astype(jnp.bfloat16), v3[:, :, sl],
                       preferred_element_type=jnp.float32)          # (TB, Lq, hd)
        out = out + jnp.dot(o.reshape(tile_b * lq, hd), a_a[sl, :],
                            preferred_element_type=jnp.float32)

    # TODO(synk): D=32 makes this a masked (32-of-128 lane) store; a lane-dense output
    # relayout was judged not worth the in-kernel reshuffle at these sizes.
    out_ref[0] = out.astype(out_ref.dtype)


def _fused_pallas_call(h_pad, rf_stacked, weights, *, n_heads, batch_size, lq, lkv, tile_b):
    D = h_pad.shape[-1]
    Dr = rf_stacked.shape[-1]
    hd = D // n_heads
    rows_q = tile_b * lq
    rows_kv = tile_b * lkv
    n_bt = batch_size // tile_b

    kernel = functools.partial(_fused_xattn_kernel, n_heads=n_heads,
                               tile_b=tile_b, lq=lq, lkv=lkv)

    def wspec(w):
        nd = w.ndim - 1
        return pl.BlockSpec((1,) + tuple(w.shape[1:]),
                            lambda c, b, _nd=nd: (c,) + (0,) * _nd)

    flops = 2 * 2 * batch_size * (lkv * Dr * 2 * D              # fused K|V projection
                                  + 3 * lq * D * D              # q / A_h / A_a projections
                                  + 2 * n_heads * lq * lkv * hd)  # scores + PV
    transcendentals = 2 * batch_size * n_heads * lq * (lkv + 1)
    bytes_accessed = (h_pad.size * h_pad.dtype.itemsize
                      + rf_stacked.size * rf_stacked.dtype.itemsize
                      + 2 * batch_size * lq * D * 4
                      + sum(int(w.size) * w.dtype.itemsize for w in weights))

    return pl.pallas_call(
        kernel,
        out_shape=jax.ShapeDtypeStruct((2, batch_size * lq, D), jnp.float32),
        grid=(2, n_bt),
        in_specs=[pl.BlockSpec((1, rows_q, D), lambda c, b: (c, b, 0)),
                  pl.BlockSpec((1, rows_kv, Dr), lambda c, b: (c, b, 0))]
                 + [wspec(w) for w in weights],
        out_specs=pl.BlockSpec((1, rows_q, D), lambda c, b: (c, b, 0)),
        compiler_params=pltpu.CompilerParams(
            dimension_semantics=("parallel", "arbitrary"),
            vmem_limit_bytes=32 * 1024 * 1024),
        cost_estimate=pl.CostEstimate(flops=int(flops),
                                      transcendentals=int(transcendentals),
                                      bytes_accessed=int(bytes_accessed)),
    )(h_pad, rf_stacked, *weights)


# ------------------------------------------------------------------------- host glue ----
_WEIGHT_ORDER = ('w_kv', 'b_kv', 'wq', 'bq', 'a_h', 'a_a', 'b_eff')
_BF16_WEIGHTS = frozenset(('w_kv', 'wq', 'a_h'))   # biases / a_a stay f32


def _prepare_stacked_params(params, n_heads):
    """Pre-transpose to [in,out], fold scale/wlq/out-proj, stack pocket+ligand cores."""
    def prep(p):
        D = p['wq'].shape[0]
        hd = D // n_heads
        scale = float(hd) ** -0.5
        wlq_t = p['wlq'].T                                   # (Dr, D) = Wlq^T
        k_eff = wlq_t @ p['wk'].T                            # (Dr, D)
        v_eff = wlq_t @ p['wv'].T
        bk_eff = p['blq'] @ p['wk'].T + p['bk']
        bv_eff = p['blq'] @ p['wv'].T + p['bv']
        wcat_h, wcat_a = p['wcat'][:, :D], p['wcat'][:, D:]
        return dict(
            w_kv=jnp.concatenate([k_eff, v_eff], axis=1),                 # (Dr, 2D)
            b_kv=jnp.concatenate([bk_eff, bv_eff]).reshape(1, 2 * D),
            wq=(p['wq'] * scale).T,
            bq=(p['bq'] * scale).reshape(1, D),
            a_h=wcat_h.T,
            a_a=(wcat_a @ p['wo']).T,
            b_eff=p['bcat'].reshape(1, D) + p['bo'].reshape(1, D) @ wcat_a.T,
        )
    pp, lp = prep(params['pocket']), prep(params['ligand'])
    out = []
    for name in _WEIGHT_ORDER:
        dt = jnp.bfloat16 if name in _BF16_WEIGHTS else jnp.float32
        out.append(jnp.stack([pp[name], lp[name]], axis=0).astype(dt))
    return tuple(out)


@functools.partial(jax.jit, static_argnames=("n_heads", "batch_size", "lq", "lkv", "tile_b"))
def _forward_impl(h, rf_stacked, core_id, flat_pos, weights, *,
                  n_heads, batch_size, lq, lkv, tile_b):
    D = h.shape[1]
    # scatter ragged rows -> padded bf16 per-core slabs (replaces the torch pad loop)
    # TODO(synk): this scatter + the gather below are an extra HBM round trip over the
    # padded slab; an in-kernel row gather via scalar-prefetch indices would remove it.
    h_pad = (jnp.zeros((2, batch_size * lq, D), jnp.bfloat16)
             .at[core_id, flat_pos].set(h.astype(jnp.bfloat16)))
    out_pad = _fused_pallas_call(h_pad, rf_stacked, weights, n_heads=n_heads,
                                 batch_size=batch_size, lq=lq, lkv=lkv, tile_b=tile_b)
    # gather back into original atom order (replaces per-batch slice + concatenate)
    return out_pad[core_id, flat_pos]


def cross_attention_respectively_forward(h, ret_feat, batch, mask_ligand, params, n_heads,
                                         pocket_ret_feat_dim=512):
    # TODO(synk): ret_feat_dim == 512 config (ligand-only core) is not wired up here.
    batch_np = np.asarray(batch).astype(np.int64)
    mask_np = np.asarray(mask_ligand, dtype=bool)
    N = batch_np.shape[0]
    B = int(batch_np.max()) + 1
    assert int(ret_feat.shape[0]) == B, "ret_feat batch dim must equal batch.max()+1"

    # Vectorized ragged bookkeeping: per-atom (core, batch) group and rank within group.
    core_id_np = mask_np.astype(np.int64)             # 0 = pocket, 1 = ligand
    key_np = core_id_np * B + batch_np
    counts = np.bincount(key_np, minlength=2 * B)
    order = np.argsort(key_np, kind="stable")
    starts = np.concatenate([[0], np.cumsum(counts)[:-1]])
    rank = np.empty(N, dtype=np.int64)
    rank[order] = np.arange(N) - np.repeat(starts, counts)

    max_n = int(counts.max())
    Lq = max(16, -(-max_n // 16) * 16)                 # multiple of 16 (bf16 packing)
    flat_pos_np = batch_np * Lq + rank
    Lkv = int(ret_feat.shape[1])

    # batch-tile size: smallest divisor of B keeping the bf16 rf tile 16-row packed
    # (fallback = whole batch, which is always a legal full-extent block).
    tile_b = next((d for d in range(1, B + 1) if B % d == 0 and (d * Lkv) % 16 == 0), B)

    weights = _prepare_stacked_params(params, n_heads)

    rf = jnp.asarray(ret_feat, jnp.float32)
    rf_stacked = jnp.stack([rf[:, :, :pocket_ret_feat_dim],
                            rf[:, :, pocket_ret_feat_dim:]], axis=0)   # (2, B, Lkv, 512)
    rf_stacked = rf_stacked.reshape(2, B * Lkv, -1).astype(jnp.bfloat16)

    h_new = _forward_impl(jnp.asarray(h, jnp.float32), rf_stacked,
                          jnp.asarray(core_id_np, jnp.int32),
                          jnp.asarray(flat_pos_np, jnp.int32),
                          weights,
                          n_heads=n_heads, batch_size=B, lq=Lq, lkv=Lkv, tile_b=tile_b)

    # The reference module returns the untouched h (its h_new is dead code). Reproduce
    # that; also return h_new so the kernel result is materialized and checkable.
    return h, h_new


# ------------------------------------------------------------------- pure-JAX reference ----
def _reference_core(h_sub, rf, batch_sub, p, n_heads):
    D = h_sub.shape[1]
    hd = D // n_heads
    scale = float(hd) ** -0.5
    kv_in = jnp.einsum('bkr,dr->bkd', rf, p['wlq']) + p['blq']
    q = h_sub @ p['wq'].T + p['bq']
    k = jnp.einsum('bkd,ed->bke', kv_in, p['wk']) + p['bk']
    v = jnp.einsum('bkd,ed->bke', kv_in, p['wv']) + p['bv']
    kb, vb = k[batch_sub], v[batch_sub]                      # (n, Lkv, D)
    n = h_sub.shape[0]
    qh = (q * scale).reshape(n, n_heads, hd)
    kh = kb.reshape(n, -1, n_heads, hd)
    vh = vb.reshape(n, -1, n_heads, hd)
    s = jnp.einsum('nhd,nkhd->nhk', qh, kh)
    pr = jax.nn.softmax(s, axis=-1)
    o = jnp.einsum('nhk,nkhd->nhd', pr, vh).reshape(n, D)
    o = o @ p['wo'].T + p['bo']
    return jnp.concatenate([h_sub, o], axis=-1) @ p['wcat'].T + p['bcat']


def reference_h_new(h, ret_feat, batch, mask_ligand, params, n_heads, pocket_ret_feat_dim=512):
    mask = np.asarray(mask_ligand, dtype=bool)
    batch_np = np.asarray(batch)
    h = jnp.asarray(h, jnp.float32)
    rf = jnp.asarray(ret_feat, jnp.float32)
    p_idx, l_idx = np.where(~mask)[0], np.where(mask)[0]
    p_out = _reference_core(h[p_idx], rf[:, :, :pocket_ret_feat_dim],
                            jnp.asarray(batch_np[p_idx]), params['pocket'], n_heads)
    l_out = _reference_core(h[l_idx], rf[:, :, pocket_ret_feat_dim:],
                            jnp.asarray(batch_np[l_idx]), params['ligand'], n_heads)
    return h.at[jnp.asarray(p_idx)].set(p_out).at[jnp.asarray(l_idx)].set(l_out)


# ----------------------------------------------------------------------------- params ----
def init_core_params(key, h_dim, ret_feat_dim):
    ks = jax.random.split(key, 12)
    s = 0.05
    n = lambda k, shp: jax.random.normal(k, shp, jnp.float32) * s
    return dict(
        wlq=n(ks[0], (h_dim, ret_feat_dim)), blq=n(ks[1], (h_dim,)),
        wq=n(ks[2], (h_dim, h_dim)), bq=n(ks[3], (h_dim,)),
        wk=n(ks[4], (h_dim, h_dim)), bk=n(ks[5], (h_dim,)),
        wv=n(ks[6], (h_dim, h_dim)), bv=n(ks[7], (h_dim,)),
        wo=n(ks[8], (h_dim, h_dim)), bo=n(ks[9], (h_dim,)),
        wcat=n(ks[10], (h_dim, 2 * h_dim)), bcat=n(ks[11], (h_dim,)),
    )


if __name__ == "__main__":
    key = jax.random.PRNGKey(0)
    h_dim, n_heads = 32, 4
    ret_feat_dim = 1024                 # -> pocket 512 + ligand 512
    B, Lkv = 2, 16

    # atoms sorted by batch: batch 0 = 7 pocket + 5 ligand ; batch 1 = 5 pocket + 7 ligand
    batch = np.array([0] * 12 + [1] * 12, dtype=np.int32)
    mask_ligand = np.array([False] * 7 + [True] * 5 + [False] * 5 + [True] * 7)
    N = batch.shape[0]

    k1, k2, k3, k4 = jax.random.split(key, 4)
    h = jax.random.normal(k1, (N, h_dim), jnp.float32)
    ret_feat = jax.random.normal(k2, (B, Lkv, ret_feat_dim), jnp.float32)

    params = dict(pocket=init_core_params(k3, h_dim, 512),
                  ligand=init_core_params(k4, h_dim, 512))

    out, h_new = cross_attention_respectively_forward(
        h, ret_feat, batch, mask_ligand, params, n_heads)
    jax.block_until_ready(h_new)

    assert out.shape == (N, h_dim) and h_new.shape == (N, h_dim)
    assert bool(jnp.all(jnp.isfinite(h_new)))
    assert bool(jnp.array_equal(out, h))          # module's (buggy) return of untouched h

    ref = reference_h_new(h, ret_feat, batch, mask_ligand, params, n_heads)
    # bf16 MXU operands + approx reciprocal -> slightly wider tolerance than pure f32
    np.testing.assert_allclose(np.asarray(h_new), np.asarray(ref), rtol=2e-2, atol=2e-2)

    print("KERNEL_OK")
</pallas_src>

<mosaic_0001>
module attributes {stable_mosaic.version = 11 : i64} {
  func.func @_fused_xattn_kernel(%arg0: i32, %arg1: i32, %arg2: memref<1x16x32xbf16, #tpu.memory_space<vmem>>, %arg3: memref<1x16x512xbf16, #tpu.memory_space<vmem>>, %arg4: memref<1x512x64xbf16, #tpu.memory_space<vmem>>, %arg5: memref<1x1x64xf32, #tpu.memory_space<vmem>>, %arg6: memref<1x32x32xbf16, #tpu.memory_space<vmem>>, %arg7: memref<1x1x32xf32, #tpu.memory_space<vmem>>, %arg8: memref<1x32x32xbf16, #tpu.memory_space<vmem>>, %arg9: memref<1x32x32xf32, #tpu.memory_space<vmem>>, %arg10: memref<1x1x32xf32, #tpu.memory_space<vmem>>, %arg11: memref<1x16x32xf32, #tpu.memory_space<vmem>>) attributes {dimension_semantics = [#tpu.dimension_semantics<parallel>, #tpu.dimension_semantics<arbitrary>], iteration_bounds = array<i64: 2, 2>, scalar_prefetch = 0 : i64, scratch_operands = 0 : i64, tpu.core_type = #tpu.core_type<tc>, window_params = [{transform_indices = @transform_0, window_bounds = array<i64: 1, 16, 32>}, {transform_indices = @transform_1, window_bounds = array<i64: 1, 16, 512>}, {transform_indices = @transform_2, window_bounds = array<i64: 1, 512, 64>}, {transform_indices = @transform_3, window_bounds = array<i64: 1, 1, 64>}, {transform_indices = @transform_4, window_bounds = array<i64: 1, 32, 32>}, {transform_indices = @transform_5, window_bounds = array<i64: 1, 1, 32>}, {transform_indices = @transform_6, window_bounds = array<i64: 1, 32, 32>}, {transform_indices = @transform_7, window_bounds = array<i64: 1, 32, 32>}, {transform_indices = @transform_8, window_bounds = array<i64: 1, 1, 32>}, {transform_indices = @transform_9, window_bounds = array<i64: 1, 16, 32>}]} {
    %c0 = arith.constant 0 : index
    %c0_0 = arith.constant 0 : index
    %c0_1 = arith.constant 0 : index
    %0 = vector.load %arg2[%c0, %c0_0, %c0_1] : memref<1x16x32xbf16, #tpu.memory_space<vmem>>, vector<1x16x32xbf16>
    %1 = vector.shape_cast %0 : vector<1x16x32xbf16> to vector<16x32xbf16>
    %c0_2 = arith.constant 0 : index
    %c0_3 = arith.constant 0 : index
    %c0_4 = arith.constant 0 : index
    %2 = vector.load %arg3[%c0_2, %c0_3, %c0_4] : memref<1x16x512xbf16, #tpu.memory_space<vmem>>, vector<1x16x512xbf16>
    %3 = vector.shape_cast %2 : vector<1x16x512xbf16> to vector<16x512xbf16>
    %c0_5 = arith.constant 0 : index
    %c0_6 = arith.constant 0 : index
    %c0_7 = arith.constant 0 : index
    %4 = vector.load %arg4[%c0_5, %c0_6, %c0_7] : memref<1x512x64xbf16, #tpu.memory_space<vmem>>, vector<1x512x64xbf16>
    %5 = vector.shape_cast %4 : vector<1x512x64xbf16> to vector<512x64xbf16>
    %cst = arith.constant dense<0.000000e+00> : vector<16x64xf32>
    %6 = tpu.matmul %3, %5, %cst {dimension_numbers = #tpu.dot_dimension_numbers<[1], [0], [0], [1], [0, 0, 1, 1], [], []>} : vector<16x512xbf16>, vector<512x64xbf16>, vector<16x64xf32> -> vector<16x64xf32>
    %c0_8 = arith.constant 0 : index
    %c0_9 = arith.constant 0 : index
    %c0_10 = arith.constant 0 : index
    %7 = vector.load %arg5[%c0_8, %c0_9, %c0_10] : memref<1x1x64xf32, #tpu.memory_space<vmem>>, vector<1x1x64xf32>
    %8 = vector.shape_cast %7 : vector<1x1x64xf32> to vector<1x64xf32>
    %9 = vector.broadcast %8 : vector<1x64xf32> to vector<16x64xf32>
    %10 = arith.addf %6, %9 : vector<16x64xf32>
    %c0_11 = arith.constant 0 : index
    %c0_12 = arith.constant 0 : index
    %c0_13 = arith.constant 0 : index
    %11 = vector.load %arg6[%c0_11, %c0_12, %c0_13] : memref<1x32x32xbf16, #tpu.memory_space<vmem>>, vector<1x32x32xbf16>
    %12 = vector.shape_cast %11 : vector<1x32x32xbf16> to vector<32x32xbf16>
    %cst_14 = arith.constant dense<0.000000e+00> : vector<16x32xf32>
    %13 = tpu.matmul %1, %12, %cst_14 {dimension_numbers = #tpu.dot_dimension_numbers<[1], [0], [0], [1], [0, 0, 1, 1], [], []>} : vector<16x32xbf16>, vector<32x32xbf16>, vector<16x32xf32> -> vector<16x32xf32>
    %c0_15 = arith.constant 0 : index
    %c0_16 = arith.constant 0 : index
    %c0_17 = arith.constant 0 : index
    %14 = vector.load %arg7[%c0_15, %c0_16, %c0_17] : memref<1x1x32xf32, #tpu.memory_space<vmem>>, vector<1x1x32xf32>
    %15 = vector.shape_cast %14 : vector<1x1x32xf32> to vector<1x32xf32>
    %16 = vector.broadcast %15 : vector<1x32xf32> to vector<16x32xf32>
    %17 = arith.addf %13, %16 : vector<16x32xf32>
    %18 = arith.truncf %17 : vector<16x32xf32> to vector<16x32xbf16>
    %19 = vector.shape_cast %18 : vector<16x32xbf16> to vector<1x16x32xbf16>
    %20 = vector.extract_strided_slice %10 {offsets = [0, 0], sizes = [16, 32], strides = [1, 1]} : vector<16x64xf32> to vector<16x32xf32>
    %21 = arith.truncf %20 : vector<16x32xf32> to vector<16x32xbf16>
    %22 = vector.shape_cast %21 : vector<16x32xbf16> to vector<1x16x32xbf16>
    %23 = vector.extract_strided_slice %10 {offsets = [0, 32], sizes = [16, 32], strides = [1, 1]} : vector<16x64xf32> to vector<16x32xf32>
    %24 = arith.truncf %23 : vector<16x32xf32> to vector<16x32xbf16>
    %25 = vector.shape_cast %24 : vector<16x32xbf16> to vector<1x16x32xbf16>
    %c0_18 = arith.constant 0 : index
    %c0_19 = arith.constant 0 : index
    %c0_20 = arith.constant 0 : index
    %26 = vector.load %arg8[%c0_18, %c0_19, %c0_20] : memref<1x32x32xbf16, #tpu.memory_space<vmem>>, vector<1x32x32xbf16>
    %27 = vector.shape_cast %26 : vector<1x32x32xbf16> to vector<32x32xbf16>
    %cst_21 = arith.constant dense<0.000000e+00> : vector<16x32xf32>
    %28 = tpu.matmul %1, %27, %cst_21 {dimension_numbers = #tpu.dot_dimension_numbers<[1], [0], [0], [1], [0, 0, 1, 1], [], []>} : vector<16x32xbf16>, vector<32x32xbf16>, vector<16x32xf32> -> vector<16x32xf32>
    %c0_22 = arith.constant 0 : index
    %c0_23 = arith.constant 0 : index
    %c0_24 = arith.constant 0 : index
    %29 = vector.load %arg10[%c0_22, %c0_23, %c0_24] : memref<1x1x32xf32, #tpu.memory_space<vmem>>, vector<1x1x32xf32>
    %30 = vector.shape_cast %29 : vector<1x1x32xf32> to vector<1x32xf32>
    %31 = vector.broadcast %30 : vector<1x32xf32> to vector<16x32xf32>
    %32 = arith.addf %28, %31 : vector<16x32xf32>
    %c0_25 = arith.constant 0 : index
    %c0_26 = arith.constant 0 : index
    %c0_27 = arith.constant 0 : index
    %33 = vector.load %arg9[%c0_25, %c0_26, %c0_27] : memref<1x32x32xf32, #tpu.memory_space<vmem>>, vector<1x32x32xf32>
    %34 = vector.shape_cast %33 : vector<1x32x32xf32> to vector<32x32xf32>
    %35 = vector.extract_strided_slice %19 {offsets = [0, 0, 0], sizes = [1, 16, 8], strides = [1, 1, 1]} : vector<1x16x32xbf16> to vector<1x16x8xbf16>
    %36 = vector.extract_strided_slice %22 {offsets = [0, 0, 0], sizes = [1, 16, 8], strides = [1, 1, 1]} : vector<1x16x32xbf16> to vector<1x16x8xbf16>
    "tpu.trace_start"() <{level = 10 : i32, message = "bqd,bkd->bqk"}> : () -> ()
    %cst_28 = arith.constant dense<0.000000e+00> : vector<1x16x16xf32>
    %37 = tpu.matmul %35, %36, %cst_28 {dimension_numbers = #tpu.dot_dimension_numbers<[2], [2], [1], [1], [0, 0, 0, 1, 1, 1], [0], [0]>} : vector<1x16x8xbf16>, vector<1x16x8xbf16>, vector<1x16x16xf32> -> vector<1x16x16xf32>
    "tpu.trace_stop"() : () -> ()
    %cst_29 = arith.constant dense<0xFF800000> : vector<1x16xf32>
    %38 = vector.multi_reduction <maximumf>, %37, %cst_29 [2] : vector<1x16x16xf32> to vector<1x16xf32>
    %39 = vector.shape_cast %38 : vector<1x16xf32> to vector<1x16x1xf32>
    %40 = vector.broadcast %39 : vector<1x16x1xf32> to vector<1x16x16xf32>
    %41 = arith.subf %37, %40 : vector<1x16x16xf32>
    %42 = math.exp %41 : vector<1x16x16xf32>
    %cst_30 = arith.constant dense<0.000000e+00> : vector<1x16xf32>
    %43 = vector.multi_reduction <add>, %42, %cst_30 [2] : vector<1x16x16xf32> to vector<1x16xf32>
    %44 = vector.shape_cast %43 : vector<1x16xf32> to vector<1x16x1xf32>
    %45 = tpu.reciprocal %44 {approx = true} : vector<1x16x1xf32> -> vector<1x16x1xf32>
    %46 = vector.broadcast %45 : vector<1x16x1xf32> to vector<1x16x16xf32>
    %47 = arith.mulf %42, %46 : vector<1x16x16xf32>
    %48 = arith.truncf %47 : vector<1x16x16xf32> to vector<1x16x16xbf16>
    %49 = vector.extract_strided_slice %25 {offsets = [0, 0, 0], sizes = [1, 16, 8], strides = [1, 1, 1]} : vector<1x16x32xbf16> to vector<1x16x8xbf16>
    "tpu.trace_start"() <{level = 10 : i32, message = "bqk,bkd->bqd"}> : () -> ()
    %cst_31 = arith.constant dense<0.000000e+00> : vector<1x16x8xf32>
    %50 = tpu.matmul %48, %49, %cst_31 {dimension_numbers = #tpu.dot_dimension_numbers<[2], [1], [1], [2], [0, 0, 0, 1, 1, 2], [0], [0]>} : vector<1x16x16xbf16>, vector<1x16x8xbf16>, vector<1x16x8xf32> -> vector<1x16x8xf32>
    "tpu.trace_stop"() : () -> ()
    %51 = vector.shape_cast %50 : vector<1x16x8xf32> to vector<16x8xf32>
    %52 = vector.extract_strided_slice %34 {offsets = [0, 0], sizes = [8, 32], strides = [1, 1]} : vector<32x32xf32> to vector<8x32xf32>
    %cst_32 = arith.constant dense<0.000000e+00> : vector<16x32xf32>
    %53 = tpu.matmul %51, %52, %cst_32 {dimension_numbers = #tpu.dot_dimension_numbers<[1], [0], [0], [1], [0, 0, 1, 1], [], []>} : vector<16x8xf32>, vector<8x32xf32>, vector<16x32xf32> -> vector<16x32xf32>
    %54 = arith.addf %32, %53 : vector<16x32xf32>
    %55 = vector.extract_strided_slice %19 {offsets = [0, 0, 8], sizes = [1, 16, 8], strides = [1, 1, 1]} : vector<1x16x32xbf16> to vector<1x16x8xbf16>
    %56 = vector.extract_strided_slice %22 {offsets = [0, 0, 8], sizes = [1, 16, 8], strides = [1, 1, 1]} : vector<1x16x32xbf16> to vector<1x16x8xbf16>
    "tpu.trace_start"() <{level = 10 : i32, message = "bqd,bkd->bqk"}> : () -> ()
    %cst_33 = arith.constant dense<0.000000e+00> : vector<1x16x16xf32>
    %57 = tpu.matmul %55, %56, %cst_33 {dimension_numbers = #tpu.dot_dimension_numbers<[2], [2], [1], [1], [0, 0, 0, 1, 1, 1], [0], [0]>} : vector<1x16x8xbf16>, vector<1x16x8xbf16>, vector<1x16x16xf32> -> vector<1x16x16xf32>
    "tpu.trace_stop"() : () -> ()
    %cst_34 = arith.constant dense<0xFF800000> : vector<1x16xf32>
    %58 = vector.multi_reduction <maximumf>, %57, %cst_34 [2] : vector<1x16x16xf32> to vector<1x16xf32>
    %59 = vector.shape_cast %58 : vector<1x16xf32> to vector<1x16x1xf32>
    %60 = vector.broadcast %59 : vector<1x16x1xf32> to vector<1x16x16xf32>
    %61 = arith.subf %57, %60 : vector<1x16x16xf32>
    %62 = math.exp %61 : vector<1x16x16xf32>
    %cst_35 = arith.constant dense<0.000000e+00> : vector<1x16xf32>
    %63 = vector.multi_reduction <add>, %62, %cst_35 [2] : vector<1x16x16xf32> to vector<1x16xf32>
    %64 = vector.shape_cast %63 : vector<1x16xf32> to vector<1x16x1xf32>
    %65 = tpu.reciprocal %64 {approx = true} : vector<1x16x1xf32> -> vector<1x16x1xf32>
    %66 = vector.broadcast %65 : vector<1x16x1xf32> to vector<1x16x16xf32>
    %67 = arith.mulf %62, %66 : vector<1x16x16xf32>
    %68 = arith.truncf %67 : vector<1x16x16xf32> to vector<1x16x16xbf16>
    %69 = vector.extract_strided_slice %25 {offsets = [0, 0, 8], sizes = [1, 16, 8], strides = [1, 1, 1]} : vector<1x16x32xbf16> to vector<1x16x8xbf16>
    "tpu.trace_start"() <{level = 10 : i32, message = "bqk,bkd->bqd"}> : () -> ()
    %cst_36 = arith.constant dense<0.000000e+00> : vector<1x16x8xf32>
    %70 = tpu.matmul %68, %69, %cst_36 {dimension_numbers = #tpu.dot_dimension_numbers<[2], [1], [1], [2], [0, 0, 0, 1, 1, 2], [0], [0]>} : vector<1x16x16xbf16>, vector<1x16x8xbf16>, vector<1x16x8xf32> -> vector<1x16x8xf32>
    "tpu.trace_stop"() : () -> ()
    %71 = vector.shape_cast %70 : vector<1x16x8xf32> to vector<16x8xf32>
    %72 = vector.extract_strided_slice %34 {offsets = [8, 0], sizes = [8, 32], strides = [1, 1]} : vector<32x32xf32> to vector<8x32xf32>
    %cst_37 = arith.constant dense<0.000000e+00> : vector<16x32xf32>
    %73 = tpu.matmul %71, %72, %cst_37 {dimension_numbers = #tpu.dot_dimension_numbers<[1], [0], [0], [1], [0, 0, 1, 1], [], []>} : vector<16x8xf32>, vector<8x32xf32>, vector<16x32xf32> -> vector<16x32xf32>
    %74 = arith.addf %54, %73 : vector<16x32xf32>
    %75 = vector.extract_strided_slice %19 {offsets = [0, 0, 16], sizes = [1, 16, 8], strides = [1, 1, 1]} : vector<1x16x32xbf16> to vector<1x16x8xbf16>
    %76 = vector.extract_strided_slice %22 {offsets = [0, 0, 16], sizes = [1, 16, 8], strides = [1, 1, 1]} : vector<1x16x32xbf16> to vector<1x16x8xbf16>
    "tpu.trace_start"() <{level = 10 : i32, message = "bqd,bkd->bqk"}> : () -> ()
    %cst_38 = arith.constant dense<0.000000e+00> : vector<1x16x16xf32>
    %77 = tpu.matmul %75, %76, %cst_38 {dimension_numbers = #tpu.dot_dimension_numbers<[2], [2], [1], [1], [0, 0, 0, 1, 1, 1], [0], [0]>} : vector<1x16x8xbf16>, vector<1x16x8xbf16>, vector<1x16x16xf32> -> vector<1x16x16xf32>
    "tpu.trace_stop"() : () -> ()
    %cst_39 = arith.constant dense<0xFF800000> : vector<1x16xf32>
    %78 = vector.multi_reduction <maximumf>, %77, %cst_39 [2] : vector<1x16x16xf32> to vector<1x16xf32>
    %79 = vector.shape_cast %78 : vector<1x16xf32> to vector<1x16x1xf32>
    %80 = vector.broadcast %79 : vector<1x16x1xf32> to vector<1x16x16xf32>
    %81 = arith.subf %77, %80 : vector<1x16x16xf32>
    %82 = math.exp %81 : vector<1x16x16xf32>
    %cst_40 = arith.constant dense<0.000000e+00> : vector<1x16xf32>
    %83 = vector.multi_reduction <add>, %82, %cst_40 [2] : vector<1x16x16xf32> to vector<1x16xf32>
    %84 = vector.shape_cast %83 : vector<1x16xf32> to vector<1x16x1xf32>
    %85 = tpu.reciprocal %84 {approx = true} : vector<1x16x1xf32> -> vector<1x16x1xf32>
    %86 = vector.broadcast %85 : vector<1x16x1xf32> to vector<1x16x16xf32>
    %87 = arith.mulf %82, %86 : vector<1x16x16xf32>
    %88 = arith.truncf %87 : vector<1x16x16xf32> to vector<1x16x16xbf16>
    %89 = vector.extract_strided_slice %25 {offsets = [0, 0, 16], sizes = [1, 16, 8], strides = [1, 1, 1]} : vector<1x16x32xbf16> to vector<1x16x8xbf16>
    "tpu.trace_start"() <{level = 10 : i32, message = "bqk,bkd->bqd"}> : () -> ()
    %cst_41 = arith.constant dense<0.000000e+00> : vector<1x16x8xf32>
    %90 = tpu.matmul %88, %89, %cst_41 {dimension_numbers = #tpu.dot_dimension_numbers<[2], [1], [1], [2], [0, 0, 0, 1, 1, 2], [0], [0]>} : vector<1x16x16xbf16>, vector<1x16x8xbf16>, vector<1x16x8xf32> -> vector<1x16x8xf32>
    "tpu.trace_stop"() : () -> ()
    %91 = vector.shape_cast %90 : vector<1x16x8xf32> to vector<16x8xf32>
    %92 = vector.extract_strided_slice %34 {offsets = [16, 0], sizes = [8, 32], strides = [1, 1]} : vector<32x32xf32> to vector<8x32xf32>
    %cst_42 = arith.constant dense<0.000000e+00> : vector<16x32xf32>
    %93 = tpu.matmul %91, %92, %cst_42 {dimension_numbers = #tpu.dot_dimension_numbers<[1], [0], [0], [1], [0, 0, 1, 1], [], []>} : vector<16x8xf32>, vector<8x32xf32>, vector<16x32xf32> -> vector<16x32xf32>
    %94 = arith.addf %74, %93 : vector<16x32xf32>
    %95 = vector.extract_strided_slice %19 {offsets = [0, 0, 24], sizes = [1, 16, 8], strides = [1, 1, 1]} : vector<1x16x32xbf16> to vector<1x16x8xbf16>
    %96 = vector.extract_strided_slice %22 {offsets = [0, 0, 24], sizes = [1, 16, 8], strides = [1, 1, 1]} : vector<1x16x32xbf16> to vector<1x16x8xbf16>
    "tpu.trace_start"() <{level = 10 : i32, message = "bqd,bkd->bqk"}> : () -> ()
    %cst_43 = arith.constant dense<0.000000e+00> : vector<1x16x16xf32>
    %97 = tpu.matmul %95, %96, %cst_43 {dimension_numbers = #tpu.dot_dimension_numbers<[2], [2], [1], [1], [0, 0, 0, 1, 1, 1], [0], [0]>} : vector<1x16x8xbf16>, vector<1x16x8xbf16>, vector<1x16x16xf32> -> vector<1x16x16xf32>
    "tpu.trace_stop"() : () -> ()
    %cst_44 = arith.constant dense<0xFF800000> : vector<1x16xf32>
    %98 = vector.multi_reduction <maximumf>, %97, %cst_44 [2] : vector<1x16x16xf32> to vector<1x16xf32>
    %99 = vector.shape_cast %98 : vector<1x16xf32> to vector<1x16x1xf32>
    %100 = vector.broadcast %99 : vector<1x16x1xf32> to vector<1x16x16xf32>
    %101 = arith.subf %97, %100 : vector<1x16x16xf32>
    %102 = math.exp %101 : vector<1x16x16xf32>
    %cst_45 = arith.constant dense<0.000000e+00> : vector<1x16xf32>
    %103 = vector.multi_reduction <add>, %102, %cst_45 [2] : vector<1x16x16xf32> to vector<1x16xf32>
    %104 = vector.shape_cast %103 : vector<1x16xf32> to vector<1x16x1xf32>
    %105 = tpu.reciprocal %104 {approx = true} : vector<1x16x1xf32> -> vector<1x16x1xf32>
    %106 = vector.broadcast %105 : vector<1x16x1xf32> to vector<1x16x16xf32>
    %107 = arith.mulf %102, %106 : vector<1x16x16xf32>
    %108 = arith.truncf %107 : vector<1x16x16xf32> to vector<1x16x16xbf16>
    %109 = vector.extract_strided_slice %25 {offsets = [0, 0, 24], sizes = [1, 16, 8], strides = [1, 1, 1]} : vector<1x16x32xbf16> to vector<1x16x8xbf16>
    "tpu.trace_start"() <{level = 10 : i32, message = "bqk,bkd->bqd"}> : () -> ()
    %cst_46 = arith.constant dense<0.000000e+00> : vector<1x16x8xf32>
    %110 = tpu.matmul %108, %109, %cst_46 {dimension_numbers = #tpu.dot_dimension_numbers<[2], [1], [1], [2], [0, 0, 0, 1, 1, 2], [0], [0]>} : vector<1x16x16xbf16>, vector<1x16x8xbf16>, vector<1x16x8xf32> -> vector<1x16x8xf32>
    "tpu.trace_stop"() : () -> ()
    %111 = vector.shape_cast %110 : vector<1x16x8xf32> to vector<16x8xf32>
    %112 = vector.extract_strided_slice %34 {offsets = [24, 0], sizes = [8, 32], strides = [1, 1]} : vector<32x32xf32> to vector<8x32xf32>
    %cst_47 = arith.constant dense<0.000000e+00> : vector<16x32xf32>
    %113 = tpu.matmul %111, %112, %cst_47 {dimension_numbers = #tpu.dot_dimension_numbers<[1], [0], [0], [1], [0, 0, 1, 1], [], []>} : vector<16x8xf32>, vector<8x32xf32>, vector<16x32xf32> -> vector<16x32xf32>
    %114 = arith.addf %94, %113 : vector<16x32xf32>
    %c0_48 = arith.constant 0 : index
    %c0_49 = arith.constant 0 : index
    %c0_50 = arith.constant 0 : index
    %115 = vector.load %arg11[%c0_48, %c0_49, %c0_50] : memref<1x16x32xf32, #tpu.memory_space<vmem>>, vector<1x16x32xf32>
    %116 = vector.shape_cast %115 : vector<1x16x32xf32> to vector<16x32xf32>
    %117 = vector.shape_cast %114 : vector<16x32xf32> to vector<1x16x32xf32>
    tpu.vector_store %arg11[%c0_48, %c0_49, %c0_50], %117 {strides = array<i32>} : memref<1x16x32xf32, #tpu.memory_space<vmem>>, vector<1x16x32xf32>,
    return
  }
  func.func @transform_0(%arg0: i32, %arg1: i32) -> (i32, i32, i32) {
    %c0_i32 = arith.constant 0 : i32
    %c0_i32_0 = arith.constant 0 : i32
    return %arg0, %arg1, %c0_i32 : i32, i32, i32
  }
  func.func @transform_1(%arg0: i32, %arg1: i32) -> (i32, i32, i32) {
    %c0_i32 = arith.constant 0 : i32
    %c0_i32_0 = arith.constant 0 : i32
    return %arg0, %arg1, %c0_i32 : i32, i32, i32
  }
  func.func @transform_2(%arg0: i32, %arg1: i32) -> (i32, i32, i32) {
    %c0_i32 = arith.constant 0 : i32
    %c0_i32_0 = arith.constant 0 : i32
    %c0_i32_1 = arith.constant 0 : i32
    return %arg0, %c0_i32, %c0_i32_0 : i32, i32, i32
  }
  func.func @transform_3(%arg0: i32, %arg1: i32) -> (i32, i32, i32) {
    %c0_i32 = arith.constant 0 : i32
    %c0_i32_0 = arith.constant 0 : i32
    %c0_i32_1 = arith.constant 0 : i32
    return %arg0, %c0_i32, %c0_i32_0 : i32, i32, i32
  }
  func.func @transform_4(%arg0: i32, %arg1: i32) -> (i32, i32, i32) {
    %c0_i32 = arith.constant 0 : i32
    %c0_i32_0 = arith.constant 0 : i32
    %c0_i32_1 = arith.constant 0 : i32
    return %arg0, %c0_i32, %c0_i32_0 : i32, i32, i32
  }
  func.func @transform_5(%arg0: i32, %arg1: i32) -> (i32, i32, i32) {
    %c0_i32 = arith.constant 0 : i32
    %c0_i32_0 = arith.constant 0 : i32
    %c0_i32_1 = arith.constant 0 : i32
    return %arg0, %c0_i32, %c0_i32_0 : i32, i32, i32
  }
  func.func @transform_6(%arg0: i32, %arg1: i32) -> (i32, i32, i32) {
    %c0_i32 = arith.constant 0 : i32
    %c0_i32_0 = arith.constant 0 : i32
    %c0_i32_1 = arith.constant 0 : i32
    return %arg0, %c0_i32, %c0_i32_0 : i32, i32, i32
  }
  func.func @transform_7(%arg0: i32, %arg1: i32) -> (i32, i32, i32) {
    %c0_i32 = arith.constant 0 : i32
    %c0_i32_0 = arith.constant 0 : i32
    %c0_i32_1 = arith.constant 0 : i32
    return %arg0, %c0_i32, %c0_i32_0 : i32, i32, i32
  }
  func.func @transform_8(%arg0: i32, %arg1: i32) -> (i32, i32, i32) {
    %c0_i32 = arith.constant 0 : i32
    %c0_i32_0 = arith.constant 0 : i32
    %c0_i32_1 = arith.constant 0 : i32
    return %arg0, %c0_i32, %c0_i32_0 : i32, i32, i32
  }
  func.func @transform_9(%arg0: i32, %arg1: i32) -> (i32, i32, i32) {
    %c0_i32 = arith.constant 0 : i32
    %c0_i32_0 = arith.constant 0 : i32
    return %arg0, %arg1, %c0_i32 : i32, i32, i32
  }
}

</mosaic_0001>

<llo_original>
// kernel: _forward_impl.1
$region0: #{_forward_impl.1}
  #allocation0 [shape = 'u32[]', space=smem, size = 0x4, offset = 0x4, fixed_abs, tag = 'smem constant byte address 0x4 - core index']
  #allocation1 [shape = 'u32[72,128]{1,0:T(1,128)}', space=vmem, size = 0x9000, scoped, tag = 'internal scratch']
  %s0 = inlined_call_operand.vmem [shape: bf16[2,32,32], index: 0, kind: input, shape index: {}]
  %s1 = inlined_call_operand.vmem [shape: bf16[2,32,512], index: 1, kind: input, shape index: {}]
  %s2 = inlined_call_operand.vmem [shape: bf16[2,512,64], index: 2, kind: input, shape index: {}]
  %s3 = inlined_call_operand.vmem [shape: f32[2,1,64], index: 3, kind: input, shape index: {}]
  %s4 = inlined_call_operand.vmem [shape: bf16[2,32,32], index: 4, kind: input, shape index: {}]
  %s5 = inlined_call_operand.vmem [shape: f32[2,1,32], index: 5, kind: input, shape index: {}]
  %s6 = inlined_call_operand.vmem [shape: bf16[2,32,32], index: 6, kind: input, shape index: {}]
  %s7 = inlined_call_operand.vmem [shape: f32[2,32,32], index: 7, kind: input, shape index: {}]
  %s8 = inlined_call_operand.vmem [shape: f32[2,1,32], index: 8, kind: input, shape index: {}]
  %s9 = inlined_call_operand.vmem [shape: f32[2,32,32], index: 9, kind: output, shape index: {}]
  %s10 = sld [smem:[#allocation0]]
  $region69: #{_forward_impl.1} parent=0
    _
  %s12 = ssub.s32 1, %s10
  %s13 = scalar_select 0, %s12, %s10
  loop: start=0, step=1, limit=6
  $region2: #{_forward_impl.1} parent=0 // loop_pre_header
    _
  $region3: #{_forward_impl.1} parent=0 // loop_header
    %s15 = sphi 0, %s19
    %p16 = scmp.ge.s32.totalorder %s15, 6
    %s22 = sphi 0, %s34
    %s23 = sphi 0, %s30
    %s24 = sphi 0, %s22
    %s25 = sphi 0, %s23
    %s26 = sphi 0, %s24
    %s27 = sphi 0, %s25
    %s39 = sphi 0, %s41
    %s42 = sphi 0, %s39
    %s43 = sphi 0, %s42
    %s59 = sphi 0, %s43
    %s67 = sphi 0, %s69
    %s70 = sphi 0, %s67
    %s71 = sphi 0, %s70
    %s87 = sphi 0, %s71
    %s93 = sphi 0, %s95
    %s96 = sphi 0, %s93
    %s97 = sphi 0, %s96
    %s113 = sphi 0, %s97
    %s119 = sphi 0, %s121
    %s122 = sphi 0, %s119
    %s123 = sphi 0, %s122
    %s139 = sphi 0, %s123
    %s145 = sphi 0, %s147
    %s148 = sphi 0, %s145
    %s149 = sphi 0, %s148
    %s165 = sphi 0, %s149
    %s171 = sphi 0, %s173
    %s174 = sphi 0, %s171
    %s175 = sphi 0, %s174
    %s191 = sphi 0, %s175
    %s197 = sphi 0, %s199
    %s200 = sphi 0, %s197
    %s201 = sphi 0, %s200
    %s217 = sphi 0, %s201
    %s223 = sphi 0, %s225
    %s226 = sphi 0, %s223
    %s227 = sphi 0, %s226
    %s243 = sphi 0, %s227
    %s249 = sphi 0, %s251
    %s252 = sphi 0, %s249
    %s253 = sphi 0, %s252
    %s269 = sphi 0, %s253
    %s277 = sphi 0, %s279
    %s280 = sphi 0, %s277
    %s281 = sphi 0, %s280
    %s297 = sphi 0, %s281
  $region4: #{_forward_impl.1} parent=0 // loop_header_branch
    %18 = sbr.rel (%p16) target = $region8
  $region5: #{_forward_impl.1} parent=0 // loop_body
    %s20 = ssub.s32 %s15, 1
    %s21 = ssub.s32 %s15, 2
    %s28 = sadd.s32 1, %s23
    %p29 = scmp.ge.s32.totalorder %s28, 2
    %s30 = scalar_select %p29, 0, %s28
    %s31 = sadd.s32 1, %s22
    %s32 = scalar_select %p29, %s31, %s22
    %p33 = scmp.ge.s32.totalorder %s32, 2
    %s34 = scalar_select %p33, 0, %s32
    %s35 = ssub.s32 %s22, %s34
    %s36 = ssub.s32 %s23, %s30
    %s37 = sor.u32 %s35, %s36
    %p38 = scmp.eq.s32.totalorder %s37, 0
    %s40 = sadd.s32 %s39, 1
    %s41 = scalar_select %p38, %s39, %s40
    %p44 = pneg %p38
    %p45 = scmp.eq.s32.totalorder %s15, 3
    %p46 = por %p44, %p45
    %p47 = scmp.ne.s32.totalorder %s39, %s42
    %p48 = scmp.eq.s32.totalorder %s15, 0
    %p49 = por %p47, %p48
    %p50 = scmp.ne.s32.totalorder %s39, %s42
    %p51 = scmp.eq.s32.totalorder %s20, 3
    %p52 = por %p50, %p51
    %p53 = scmp.ne.s32.totalorder %s42, %s43
    %p54 = scmp.eq.s32.totalorder %s20, 0
    %p55 = por %p53, %p54
    %p56 = scmp.ne.s32.totalorder %s42, %s43
    %p57 = scmp.eq.s32.totalorder %s21, 3
    %p58 = por %p56, %p57
    %p60 = scmp.ne.s32.totalorder %s43, %s59
    %p61 = scmp.eq.s32.totalorder %s21, 0
    %p62 = por %p60, %p61
    %s63 = ssub.s32 %s22, %s34
    %s64 = ssub.s32 %s23, %s30
    %s65 = sor.u32 %s63, %s64
    %p66 = scmp.eq.s32.totalorder %s65, 0
    %s68 = sadd.s32 %s67, 1
    %s69 = scalar_select %p66, %s67, %s68
    %p72 = pneg %p66
    %p73 = scmp.eq.s32.totalorder %s15, 3
    %p74 = por %p72, %p73
    %p75 = scmp.ne.s32.totalorder %s67, %s70
    %p76 = scmp.eq.s32.totalorder %s15, 0
    %p77 = por %p75, %p76
    %p78 = scmp.ne.s32.totalorder %s67, %s70
    %p79 = scmp.eq.s32.totalorder %s20, 3
    %p80 = por %p78, %p79
    %p81 = scmp.ne.s32.totalorder %s70, %s71
    %p82 = scmp.eq.s32.totalorder %s20, 0
    %p83 = por %p81, %p82
    %p84 = scmp.ne.s32.totalorder %s70, %s71
    %p85 = scmp.eq.s32.totalorder %s21, 3
    %p86 = por %p84, %p85
    %p88 = scmp.ne.s32.totalorder %s71, %s87
    %p89 = scmp.eq.s32.totalorder %s21, 0
    %p90 = por %p88, %p89
    %s91 = ssub.s32 %s22, %s34
    %p92 = scmp.eq.s32.totalorder %s91, 0
    %s94 = sadd.s32 %s93, 1
    %s95 = scalar_select %p92, %s93, %s94
    %p98 = pneg %p92
    %p99 = scmp.eq.s32.totalorder %s15, 3
    %p100 = por %p98, %p99
    %p101 = scmp.ne.s32.totalorder %s93, %s96
    %p102 = scmp.eq.s32.totalorder %s15, 0
    %p103 = por %p101, %p102
    %p104 = scmp.ne.s32.totalorder %s93, %s96
    %p105 = scmp.eq.s32.totalorder %s20, 3
    %p106 = por %p104, %p105
    %p107 = scmp.ne.s32.totalorder %s96, %s97
    %p108 = scmp.eq.s32.totalorder %s20, 0
    %p109 = por %p107, %p108
    %p110 = scmp.ne.s32.totalorder %s96, %s97
    %p111 = scmp.eq.s32.totalorder %s21, 3
    %p112 = por %p110, %p111
    %p114 = scmp.ne.s32.totalorder %s97, %s113
    %p115 = scmp.eq.s32.totalorder %s21, 0
    %p116 = por %p114, %p115
    %s117 = ssub.s32 %s22, %s34
    %p118 = scmp.eq.s32.totalorder %s117, 0
    %s120 = sadd.s32 %s119, 1
    %s121 = scalar_select %p118, %s119, %s120
    %p124 = pneg %p118
    %p125 = scmp.eq.s32.totalorder %s15, 3
    %p126 = por %p124, %p125
    %p127 = scmp.ne.s32.totalorder %s119, %s122
    %p128 = scmp.eq.s32.totalorder %s15, 0
    %p129 = por %p127, %p128
    %p130 = scmp.ne.s32.totalorder %s119, %s122
    %p131 = scmp.eq.s32.totalorder %s20, 3
    %p132 = por %p130, %p131
    %p133 = scmp.ne.s32.totalorder %s122, %s123
    %p134 = scmp.eq.s32.totalorder %s20, 0
    %p135 = por %p133, %p134
    %p136 = scmp.ne.s32.totalorder %s122, %s123
    %p137 = scmp.eq.s32.totalorder %s21, 3
    %p138 = por %p136, %p137
    %p140 = scmp.ne.s32.totalorder %s123, %s139
    %p141 = scmp.eq.s32.totalorder %s21, 0
    %p142 = por %p140, %p141
    %s143 = ssub.s32 %s22, %s34
    %p144 = scmp.eq.s32.totalorder %s143, 0
    %s146 = sadd.s32 %s145, 1
    %s147 = scalar_select %p144, %s145, %s146
    %p150 = pneg %p144
    %p151 = scmp.eq.s32.totalorder %s15, 3
    %p152 = por %p150, %p151
    %p153 = scmp.ne.s32.totalorder %s145, %s148
    %p154 = scmp.eq.s32.totalorder %s15, 0
    %p155 = por %p153, %p154
    %p156 = scmp.ne.s32.totalorder %s145, %s148
    %p157 = scmp.eq.s32.totalorder %s20, 3
    %p158 = por %p156, %p157
    %p159 = scmp.ne.s32.totalorder %s148, %s149
    %p160 = scmp.eq.s32.totalorder %s20, 0
    %p161 = por %p159, %p160
    %p162 = scmp.ne.s32.totalorder %s148, %s149
    %p163 = scmp.eq.s32.totalorder %s21, 3
    %p164 = por %p162, %p163
    %p166 = scmp.ne.s32.totalorder %s149, %s165
    %p167 = scmp.eq.s32.totalorder %s21, 0
    %p168 = por %p166, %p167
    %s169 = ssub.s32 %s22, %s34
    %p170 = scmp.eq.s32.totalorder %s169, 0
    %s172 = sadd.s32 %s171, 1
    %s173 = scalar_select %p170, %s171, %s172
    %p176 = pneg %p170
    %p177 = scmp.eq.s32.totalorder %s15, 3
    %p178 = por %p176, %p177
    %p179 = scmp.ne.s32.totalorder %s171, %s174
    %p180 = scmp.eq.s32.totalorder %s15, 0
    %p181 = por %p179, %p180
    %p182 = scmp.ne.s32.totalorder %s171, %s174
    %p183 = scmp.eq.s32.totalorder %s20, 3
    %p184 = por %p182, %p183
    %p185 = scmp.ne.s32.totalorder %s174, %s175
    %p186 = scmp.eq.s32.totalorder %s20, 0
    %p187 = por %p185, %p186
    %p188 = scmp.ne.s32.totalorder %s174, %s175
    %p189 = scmp.eq.s32.totalorder %s21, 3
    %p190 = por %p188, %p189
    %p192 = scmp.ne.s32.totalorder %s175, %s191
    %p193 = scmp.eq.s32.totalorder %s21, 0
    %p194 = por %p192, %p193
    %s195 = ssub.s32 %s22, %s34
    %p196 = scmp.eq.s32.totalorder %s195, 0
    %s198 = sadd.s32 %s197, 1
    %s199 = scalar_select %p196, %s197, %s198
    %p202 = pneg %p196
    %p203 = scmp.eq.s32.totalorder %s15, 3
    %p204 = por %p202, %p203
    %p205 = scmp.ne.s32.totalorder %s197, %s200
    %p206 = scmp.eq.s32.totalorder %s15, 0
    %p207 = por %p205, %p206
    %p208 = scmp.ne.s32.totalorder %s197, %s200
    %p209 = scmp.eq.s32.totalorder %s20, 3
    %p210 = por %p208, %p209
    %p211 = scmp.ne.s32.totalorder %s200, %s201
    %p212 = scmp.eq.s32.totalorder %s20, 0
    %p213 = por %p211, %p212
    %p214 = scmp.ne.s32.totalorder %s200, %s201
    %p215 = scmp.eq.s32.totalorder %s21, 3
    %p216 = por %p214, %p215
    %p218 = scmp.ne.s32.totalorder %s201, %s217
    %p219 = scmp.eq.s32.totalorder %s21, 0
    %p220 = por %p218, %p219
    %s221 = ssub.s32 %s22, %s34
    %p222 = scmp.eq.s32.totalorder %s221, 0
    %s224 = sadd.s32 %s223, 1
    %s225 = scalar_select %p222, %s223, %s224
    %p228 = pneg %p222
    %p229 = scmp.eq.s32.totalorder %s15, 3
    %p230 = por %p228, %p229
    %p231 = scmp.ne.s32.totalorder %s223, %s226
    %p232 = scmp.eq.s32.totalorder %s15, 0
    %p233 = por %p231, %p232
    %p234 = scmp.ne.s32.totalorder %s223, %s226
    %p235 = scmp.eq.s32.totalorder %s20, 3
    %p236 = por %p234, %p235
    %p237 = scmp.ne.s32.totalorder %s226, %s227
    %p238 = scmp.eq.s32.totalorder %s20, 0
    %p239 = por %p237, %p238
    %p240 = scmp.ne.s32.totalorder %s226, %s227
    %p241 = scmp.eq.s32.totalorder %s21, 3
    %p242 = por %p240, %p241
    %p244 = scmp.ne.s32.totalorder %s227, %s243
    %p245 = scmp.eq.s32.totalorder %s21, 0
    %p246 = por %p244, %p245
    %s247 = ssub.s32 %s22, %s34
    %p248 = scmp.eq.s32.totalorder %s247, 0
    %s250 = sadd.s32 %s249, 1
    %s251 = scalar_select %p248, %s249, %s250
    %p254 = pneg %p248
    %p255 = scmp.eq.s32.totalorder %s15, 3
    %p256 = por %p254, %p255
    %p257 = scmp.ne.s32.totalorder %s249, %s252
    %p258 = scmp.eq.s32.totalorder %s15, 0
    %p259 = por %p257, %p258
    %p260 = scmp.ne.s32.totalorder %s249, %s252
    %p261 = scmp.eq.s32.totalorder %s20, 3
    %p262 = por %p260, %p261
    %p263 = scmp.ne.s32.totalorder %s252, %s253
    %p264 = scmp.eq.s32.totalorder %s20, 0
    %p265 = por %p263, %p264
    %p266 = scmp.ne.s32.totalorder %s252, %s253
    %p267 = scmp.eq.s32.totalorder %s21, 3
    %p268 = por %p266, %p267
    %p270 = scmp.ne.s32.totalorder %s253, %s269
    %p271 = scmp.eq.s32.totalorder %s21, 0
    %p272 = por %p270, %p271
    %s273 = ssub.s32 %s22, %s34
    %s274 = ssub.s32 %s23, %s30
    %s275 = sor.u32 %s273, %s274
    %p276 = scmp.eq.s32.totalorder %s275, 0
    %s278 = sadd.s32 %s277, 1
    %s279 = scalar_select %p276, %s277, %s278
    %p282 = pneg %p276
    %p283 = scmp.eq.s32.totalorder %s15, 3
    %p284 = por %p282, %p283
    %p285 = scmp.ne.s32.totalorder %s277, %s280
    %p286 = scmp.eq.s32.totalorder %s15, 0
    %p287 = por %p285, %p286
    %p288 = scmp.ne.s32.totalorder %s277, %s280
    %p289 = scmp.eq.s32.totalorder %s20, 3
    %p290 = por %p288, %p289
    %p291 = scmp.ne.s32.totalorder %s280, %s281
    %p292 = scmp.eq.s32.totalorder %s20, 0
    %p293 = por %p291, %p292
    %p294 = scmp.ne.s32.totalorder %s280, %s281
    %p295 = scmp.eq.s32.totalorder %s21, 3
    %p296 = por %p294, %p295
    %p298 = scmp.ne.s32.totalorder %s281, %s297
    %p299 = scmp.eq.s32.totalorder %s21, 0
    %p300 = por %p298, %p299
    %p301 = scmp.le.s32.totalorder 1, %s15
    %p302 = scmp.lt.s32.totalorder %s15, 5
    %p303 = pnand %p301, %p302
    %p304 = pneg %p303
    // Predicated region
    $region9: #{_forward_impl.1} parent=5 // pred_check
      _
    $region10: #{_forward_impl.1} parent=5 // pred_check_branch
      %306 = sbr.rel (%p303) target = $region12
    $region11: #{_forward_impl.1} parent=5 // pred_region
      %s307 = ssub.s32 %s15, 1
    $region12: #{_forward_impl.1} parent=5 // pred_fallthru
      _
    %p308 = scmp.lt.s32.totalorder %s15, 4
    // Predicated region
    $region13: #{_forward_impl.1} parent=5 // pred_check
      %p309 = pneg %p308
    $region14: #{_forward_impl.1} parent=5 // pred_check_branch
      %311 = sbr.rel (%p309) target = $region16
    $region15: #{_forward_impl.1} parent=5 // pred_region
      // Predicated region
      $region17: #{_forward_impl.1} parent=15 // pred_check
        %p312 = pneg %p49
      $region18: #{_forward_impl.1} parent=15 // pred_check_branch
        %314 = sbr.rel (%p312) target = $region20
      $region19: #{_forward_impl.1} parent=15 // pred_region
        %s315 = smul.u32 2, %s23
        %p316 = scmp.lt.s32.totalorder %s22, 1
        %s317 = scalar_select %p316, %s22, 1
        %p318 = scmp.lt.s32.totalorder %s315, 3
        %s319 = scalar_select %p318, %s315, 3
        %s320 = smul.addr %s317, 4
        %s321 = sadd.s32 %s319, %s320
        %s322 = smul.addr %s321, 4
        %s323 = scalar_lea.vmem %s0, %s322
        %s324 = smul.u32 2, %s23
      $region20: #{_forward_impl.1} parent=15 // pred_fallthru
        _
      // Predicated region
      $region21: #{_forward_impl.1} parent=15 // pred_check
        %p325 = pneg %p77
      $region22: #{_forward_impl.1} parent=15 // pred_check_branch
        %327 = sbr.rel (%p325) target = $region24
      $region23: #{_forward_impl.1} parent=15 // pred_region
        %s328 = smul.u32 2, %s23
        %p329 = scmp.lt.s32.totalorder %s22, 1
        %s330 = scalar_select %p329, %s22, 1
        %p331 = scmp.lt.s32.totalorder %s328, 3
        %s332 = scalar_select %p331, %s328, 3
        %s333 = smul.addr %s332, 4
        %s334 = smul.addr %s330, 16
        %s335 = sadd.s32 %s333, %s334
        %s336 = smul.addr %s335, 4
        %s337 = scalar_lea.vmem %s1, %s336
        %s338 = smul.u32 2, %s23
      $region24: #{_forward_impl.1} parent=15 // pred_fallthru
        _
      // Predicated region
      $region25: #{_forward_impl.1} parent=15 // pred_check
        %p339 = pneg %p103
      $region26: #{_forward_impl.1} parent=15 // pred_check_branch
        %341 = sbr.rel (%p339) target = $region28
      $region27: #{_forward_impl.1} parent=15 // pred_region
        %p342 = scmp.lt.s32.totalorder %s22, 1
        %s343 = scalar_select %p342, %s22, 1
        %s344 = smul.addr %s343, 64
        %s345 = smul.addr %s344, 4
        %s346 = scalar_lea.vmem %s2, %s345
      $region28: #{_forward_impl.1} parent=15 // pred_fallthru
        _
      // Predicated region
      $region29: #{_forward_impl.1} parent=15 // pred_check
        %p347 = pneg %p129
      $region30: #{_forward_impl.1} parent=15 // pred_check_branch
        %349 = sbr.rel (%p347) target = $region32
      $region31: #{_forward_impl.1} parent=15 // pred_region
        %p350 = scmp.lt.s32.totalorder %s22, 1
        %s351 = scalar_select %p350, %s22, 1
        %s352 = scalar_lea.vmem %s3, %s351
      $region32: #{_forward_impl.1} parent=15 // pred_fallthru
        _
      // Predicated region
      $region33: #{_forward_impl.1} parent=15 // pred_check
        %p353 = pneg %p155
      $region34: #{_forward_impl.1} parent=15 // pred_check_branch
        %355 = sbr.rel (%p353) target = $region36
      $region35: #{_forward_impl.1} parent=15 // pred_region
        %p356 = scmp.lt.s32.totalorder %s22, 1
        %s357 = scalar_select %p356, %s22, 1
        %s358 = smul.addr %s357, 4
        %s359 = smul.addr %s358, 4
        %s360 = scalar_lea.vmem %s4, %s359
      $region36: #{_forward_impl.1} parent=15 // pred_fallthru
        _
      // Predicated region
      $region37: #{_forward_impl.1} parent=15 // pred_check
        %p361 = pneg %p181
      $region38: #{_forward_impl.1} parent=15 // pred_check_branch
        %363 = sbr.rel (%p361) target = $region40
      $region39: #{_forward_impl.1} parent=15 // pred_region
        %p364 = scmp.lt.s32.totalorder %s22, 1
        %s365 = scalar_select %p364, %s22, 1
        %s366 = scalar_lea.vmem %s5, %s365
      $region40: #{_forward_impl.1} parent=15 // pred_fallthru
        _
      // Predicated region
      $region41: #{_forward_impl.1} parent=15 // pred_check
        %p367 = pneg %p207
      $region42: #{_forward_impl.1} parent=15 // pred_check_branch
        %369 = sbr.rel (%p367) target = $region44
      $region43: #{_forward_impl.1} parent=15 // pred_region
        %p370 = scmp.lt.s32.totalorder %s22, 1
        %s371 = scalar_select %p370, %s22, 1
        %s372 = smul.addr %s371, 4
        %s373 = smul.addr %s372, 4
        %s374 = scalar_lea.vmem %s6, %s373
      $region44: #{_forward_impl.1} parent=15 // pred_fallthru
        _
      // Predicated region
      $region45: #{_forward_impl.1} parent=15 // pred_check
        %p375 = pneg %p233
      $region46: #{_forward_impl.1} parent=15 // pred_check_branch
        %377 = sbr.rel (%p375) target = $region48
      $region47: #{_forward_impl.1} parent=15 // pred_region
        %p378 = scmp.lt.s32.totalorder %s22, 1
        %s379 = scalar_select %p378, %s22, 1
        %s380 = smul.addr %s379, 4
        %s381 = smul.addr %s380, 8
        %s382 = scalar_lea.vmem %s7, %s381
      $region48: #{_forward_impl.1} parent=15 // pred_fallthru
        _
      // Predicated region
      $region49: #{_forward_impl.1} parent=15 // pred_check
        %p383 = pneg %p259
      $region50: #{_forward_impl.1} parent=15 // pred_check_branch
        %385 = sbr.rel (%p383) target = $region52
      $region51: #{_forward_impl.1} parent=15 // pred_region
        %p386 = scmp.lt.s32.totalorder %s22, 1
        %s387 = scalar_select %p386, %s22, 1
        %s388 = scalar_lea.vmem %s8, %s387
      $region52: #{_forward_impl.1} parent=15 // pred_fallthru
        _
    $region16: #{_forward_impl.1} parent=5 // pred_fallthru
      _
    %p389 = scmp.le.s32.totalorder 1, %s15
    %p390 = scmp.lt.s32.totalorder %s15, 5
    %p391 = pnand %p389, %p390
    %p392 = pneg %p391
    // Predicated region
    $region53: #{_forward_impl.1} parent=5 // pred_check
      _
    $region54: #{_forward_impl.1} parent=5 // pred_check_branch
      %394 = sbr.rel (%p391) target = $region56
    $region55: #{_forward_impl.1} parent=5 // pred_region
      %s395 = ssub.s32 %s15, 1
      %s396 = smul.u32 2, %s25
      %p397 = scmp.lt.s32.totalorder %s24, 1
      %s398 = scalar_select %p397, %s24, 1
      %p399 = scmp.lt.s32.totalorder %s396, 3
      %s400 = scalar_select %p399, %s396, 3
      %s401 = smul.addr %s398, 4
      %s402 = sadd.s32 %s400, %s401
      %s403 = smul.addr %s402, 4
      %s404 = scalar_lea.vmem %s0, %s403
      %p405 = pneg %p55
      %p406 = pneg %p52
      %s407 = smul.u32 2, %s25
      %p408 = scmp.lt.s32.totalorder %s24, 1
      %s409 = scalar_select %p408, %s24, 1
      %p410 = scmp.lt.s32.totalorder %s407, 3
      %s411 = scalar_select %p410, %s407, 3
      %s412 = smul.addr %s411, 4
      %s413 = smul.addr %s409, 16
      %s414 = sadd.s32 %s412, %s413
      %s415 = smul.addr %s414, 4
      %s416 = scalar_lea.vmem %s1, %s415
      %p417 = pneg %p83
      %p418 = pneg %p80
      %p419 = scmp.lt.s32.totalorder %s24, 1
      %s420 = scalar_select %p419, %s24, 1
      %s421 = smul.addr %s420, 64
      %s422 = smul.addr %s421, 4
      %s423 = scalar_lea.vmem %s2, %s422
      %p424 = pneg %p109
      %p425 = pneg %p106
      %p426 = scmp.lt.s32.totalorder %s24, 1
      %s427 = scalar_select %p426, %s24, 1
      %s428 = scalar_lea.vmem %s3, %s427
      %p429 = pneg %p135
      %p430 = pneg %p132
      %p431 = scmp.lt.s32.totalorder %s24, 1
      %s432 = scalar_select %p431, %s24, 1
      %s433 = smul.addr %s432, 4
      %s434 = smul.addr %s433, 4
      %s435 = scalar_lea.vmem %s4, %s434
      %p436 = pneg %p161
      %p437 = pneg %p158
      %p438 = scmp.lt.s32.totalorder %s24, 1
      %s439 = scalar_select %p438, %s24, 1
      %s440 = scalar_lea.vmem %s5, %s439
      %p441 = pneg %p187
      %p442 = pneg %p184
      %p443 = scmp.lt.s32.totalorder %s24, 1
      %s444 = scalar_select %p443, %s24, 1
      %s445 = smul.addr %s444, 4
      %s446 = smul.addr %s445, 4
      %s447 = scalar_lea.vmem %s6, %s446
      %p448 = pneg %p213
      %p449 = pneg %p210
      %p450 = scmp.lt.s32.totalorder %s24, 1
      %s451 = scalar_select %p450, %s24, 1
      %s452 = smul.addr %s451, 4
      %s453 = smul.addr %s452, 8
      %s454 = scalar_lea.vmem %s7, %s453
      %p455 = pneg %p239
      %p456 = pneg %p236
      %p457 = scmp.lt.s32.totalorder %s24, 1
      %s458 = scalar_select %p457, %s24, 1
      %s459 = scalar_lea.vmem %s8, %s458
      %p460 = pneg %p265
      %p461 = pneg %p262
      %p462 = pneg %p293
      %p463 = pneg %p290
      %s464 = smul.u32 2, %s25
      %p465 = scmp.lt.s32.totalorder %s24, 1
      %s466 = scalar_select %p465, %s24, 1
      %p467 = scmp.lt.s32.totalorder %s464, 3
      %s468 = scalar_select %p467, %s464, 3
      %s469 = smul.addr %s466, 4
      %s470 = sadd.s32 %s468, %s469
      %s471 = smul.addr %s470, 8
      %s472 = scalar_lea.vmem %s9, %s471
      %s473 = smul.u32 2, %s25
      %p474 = scmp.lt.s32.totalorder %s24, 1
      %s475 = scalar_select %p474, %s24, 1
      %p476 = scmp.lt.s32.totalorder %s473, 3
      %s477 = scalar_select %p476, %s473, 3
      %s478 = smul.addr %s475, 4
      %s479 = sadd.s32 %s477, %s478
      %s480 = smul.addr %s479, 4
      %s481 = scalar_lea.vmem %s0, %s480
      %s482 = smul.u32 2, %s25
      %s483 = smul.u32 2, %s25
      %p484 = scmp.lt.s32.totalorder %s24, 1
      %s485 = scalar_select %p484, %s24, 1
      %p486 = scmp.lt.s32.totalorder %s483, 3
      %s487 = scalar_select %p486, %s483, 3
      %s488 = smul.addr %s487, 4
      %s489 = smul.addr %s485, 16
      %s490 = sadd.s32 %s488, %s489
      %s491 = smul.addr %s490, 4
      %s492 = scalar_lea.vmem %s1, %s491
      %s493 = smul.u32 2, %s25
      %p494 = scmp.lt.s32.totalorder %s24, 1
      %s495 = scalar_select %p494, %s24, 1
      %s496 = smul.addr %s495, 64
      %s497 = smul.addr %s496, 4
      %s498 = scalar_lea.vmem %s2, %s497
      %p499 = scmp.lt.s32.totalorder %s24, 1
      %s500 = scalar_select %p499, %s24, 1
      %s501 = scalar_lea.vmem %s3, %s500
      %p502 = scmp.lt.s32.totalorder %s24, 1
      %s503 = scalar_select %p502, %s24, 1
      %s504 = smul.addr %s503, 4
      %s505 = smul.addr %s504, 4
      %s506 = scalar_lea.vmem %s4, %s505
      %p507 = scmp.lt.s32.totalorder %s24, 1
      %s508 = scalar_select %p507, %s24, 1
      %s509 = scalar_lea.vmem %s5, %s508
      %p510 = scmp.lt.s32.totalorder %s24, 1
      %s511 = scalar_select %p510, %s24, 1
      %s512 = smul.addr %s511, 4
      %s513 = smul.addr %s512, 4
      %s514 = scalar_lea.vmem %s6, %s513
      %p515 = scmp.lt.s32.totalorder %s24, 1
      %s516 = scalar_select %p515, %s24, 1
      %s517 = smul.addr %s516, 4
      %s518 = smul.addr %s517, 8
      %s519 = scalar_lea.vmem %s7, %s518
      %p520 = scmp.lt.s32.totalorder %s24, 1
      %s521 = scalar_select %p520, %s24, 1
      %s522 = scalar_lea.vmem %s8, %s521
      %s523 = smul.u32 2, %s25
      %p524 = scmp.lt.s32.totalorder %s24, 1
      %s525 = scalar_select %p524, %s24, 1
      %p526 = scmp.lt.s32.totalorder %s523, 3
      %s527 = scalar_select %p526, %s523, 3
      %s528 = smul.addr %s525, 4
      %s529 = sadd.s32 %s527, %s528
      %s530 = smul.addr %s529, 8
      %s531 = scalar_lea.vmem %s9, %s530
      %s532 = smul.u32 2, %s25
      %v534 = vld [vmem:[%s481] sm:$0xf]
      %v535 = vld [vmem:[%s481 + $0x4] sm:$0xf]
      %v536 = vld [vmem:[%s492] sm:$0xff]
      %v537 = vld [vmem:[%s492 + $0x8] sm:$0xff]
      %v538 = vld [vmem:[%s492 + $0x10] sm:$0xff]
      %v539 = vld [vmem:[%s492 + $0x18] sm:$0xff]
      %v540 = vld [vmem:[%s498] sm:$0xf]
      %v541 = vld [vmem:[%s498 + $0x4] sm:$0xf]
      %v542 = vld [vmem:[%s498 + $0x8] sm:$0xf]
      %v543 = vld [vmem:[%s498 + $0xc] sm:$0xf]
      %v544 = vld [vmem:[%s498 + $0x10] sm:$0xf]
      %v545 = vld [vmem:[%s498 + $0x14] sm:$0xf]
      %v546 = vld [vmem:[%s498 + $0x18] sm:$0xf]
      %v547 = vld [vmem:[%s498 + $0x1c] sm:$0xf]
      %v548 = vld [vmem:[%s498 + $0x20] sm:$0xf]
      %v549 = vld [vmem:[%s498 + $0x24] sm:$0xf]
      %v550 = vld [vmem:[%s498 + $0x28] sm:$0xf]
      %v551 = vld [vmem:[%s498 + $0x2c] sm:$0xf]
      %v552 = vld [vmem:[%s498 + $0x30] sm:$0xf]
      %v553 = vld [vmem:[%s498 + $0x34] sm:$0xf]
      %v554 = vld [vmem:[%s498 + $0x38] sm:$0xf]
      %v555 = vld [vmem:[%s498 + $0x3c] sm:$0xf]
      %v556 = vld [vmem:[%s498 + $0x40] sm:$0xf]
      %v557 = vld [vmem:[%s498 + $0x44] sm:$0xf]
      %v558 = vld [vmem:[%s498 + $0x48] sm:$0xf]
      %v559 = vld [vmem:[%s498 + $0x4c] sm:$0xf]
      %v560 = vld [vmem:[%s498 + $0x50] sm:$0xf]
      %v561 = vld [vmem:[%s498 + $0x54] sm:$0xf]
      %v562 = vld [vmem:[%s498 + $0x58] sm:$0xf]
      %v563 = vld [vmem:[%s498 + $0x5c] sm:$0xf]
      %v564 = vld [vmem:[%s498 + $0x60] sm:$0xf]
      %v565 = vld [vmem:[%s498 + $0x64] sm:$0xf]
      %v566 = vld [vmem:[%s498 + $0x68] sm:$0xf]
      %v567 = vld [vmem:[%s498 + $0x6c] sm:$0xf]
      %v568 = vld [vmem:[%s498 + $0x70] sm:$0xf]
      %v569 = vld [vmem:[%s498 + $0x74] sm:$0xf]
      %v570 = vld [vmem:[%s498 + $0x78] sm:$0xf]
      %v571 = vld [vmem:[%s498 + $0x7c] sm:$0xf]
      %v572 = vld [vmem:[%s498 + $0x80] sm:$0xf]
      %v573 = vld [vmem:[%s498 + $0x84] sm:$0xf]
      %v574 = vld [vmem:[%s498 + $0x88] sm:$0xf]
      %v575 = vld [vmem:[%s498 + $0x8c] sm:$0xf]
      %v576 = vld [vmem:[%s498 + $0x90] sm:$0xf]
      %v577 = vld [vmem:[%s498 + $0x94] sm:$0xf]
      %v578 = vld [vmem:[%s498 + $0x98] sm:$0xf]
      %v579 = vld [vmem:[%s498 + $0x9c] sm:$0xf]
      %v580 = vld [vmem:[%s498 + $0xa0] sm:$0xf]
      %v581 = vld [vmem:[%s498 + $0xa4] sm:$0xf]
      %v582 = vld [vmem:[%s498 + $0xa8] sm:$0xf]
      %v583 = vld [vmem:[%s498 + $0xac] sm:$0xf]
      %v584 = vld [vmem:[%s498 + $0xb0] sm:$0xf]
      %v585 = vld [vmem:[%s498 + $0xb4] sm:$0xf]
      %v586 = vld [vmem:[%s498 + $0xb8] sm:$0xf]
      %v587 = vld [vmem:[%s498 + $0xbc] sm:$0xf]
      %v588 = vld [vmem:[%s498 + $0xc0] sm:$0xf]
      %v589 = vld [vmem:[%s498 + $0xc4] sm:$0xf]
      %v590 = vld [vmem:[%s498 + $0xc8] sm:$0xf]
      %v591 = vld [vmem:[%s498 + $0xcc] sm:$0xf]
      %v592 = vld [vmem:[%s498 + $0xd0] sm:$0xf]
      %v593 = vld [vmem:[%s498 + $0xd4] sm:$0xf]
      %v594 = vld [vmem:[%s498 + $0xd8] sm:$0xf]
      %v595 = vld [vmem:[%s498 + $0xdc] sm:$0xf]
      %v596 = vld [vmem:[%s498 + $0xe0] sm:$0xf]
      %v597 = vld [vmem:[%s498 + $0xe4] sm:$0xf]
      %v598 = vld [vmem:[%s498 + $0xe8] sm:$0xf]
      %v599 = vld [vmem:[%s498 + $0xec] sm:$0xf]
      %v600 = vld [vmem:[%s498 + $0xf0] sm:$0xf]
      %v601 = vld [vmem:[%s498 + $0xf4] sm:$0xf]
      %v602 = vld [vmem:[%s498 + $0xf8] sm:$0xf]
      %v603 = vld [vmem:[%s498 + $0xfc] sm:$0xf]
      %v604 = vld [vmem:[%s501] sm:$0x1]
      %v606 = vperm.slane %v604, 0
      %v612 = vunpack.c.l.b16 %v536
      %v613 = vunpack.c.h.b16 %v536
      %v614 = vunpack.c.l.b16 %v537
      %v615 = vunpack.c.h.b16 %v537
      %v616 = vunpack.c.l.b16 %v538
      %v617 = vunpack.c.h.b16 %v538
      %v618 = vunpack.c.l.b16 %v539
      %v619 = vunpack.c.h.b16 %v539
      %v620 = vpack.c.b16 %v616, %v612
      %v621 = vpack.c.b16 %v617, %v613
      %v622 = vpack.c.b16 %v618, %v614
      %v623 = vpack.c.b16 %v619, %v615
      %v692 = vunpack.c.l.b16 %v540
      %v693 = vunpack.c.l.b16 %v541
      %v694 = vunpack.c.l.b16 %v542
      %v695 = vunpack.c.l.b16 %v543
      %v696 = vunpack.c.l.b16 %v544
      %v697 = vunpack.c.l.b16 %v545
      %v698 = vunpack.c.l.b16 %v546
      %v699 = vunpack.c.l.b16 %v547
      %v700 = vunpack.c.l.b16 %v548
      %v701 = vunpack.c.l.b16 %v549
      %v702 = vunpack.c.l.b16 %v550
      %v703 = vunpack.c.l.b16 %v551
      %v704 = vunpack.c.l.b16 %v552
      %v705 = vunpack.c.l.b16 %v553
      %v706 = vunpack.c.l.b16 %v554
      %v707 = vunpack.c.l.b16 %v555
      %v708 = vunpack.c.l.b16 %v556
      %v709 = vunpack.c.l.b16 %v557
      %v710 = vunpack.c.l.b16 %v558
      %v711 = vunpack.c.l.b16 %v559
      %v712 = vunpack.c.l.b16 %v560
      %v713 = vunpack.c.l.b16 %v561
      %v714 = vunpack.c.l.b16 %v562
      %v715 = vunpack.c.l.b16 %v563
      %v716 = vunpack.c.l.b16 %v564
      %v717 = vunpack.c.l.b16 %v565
      %v718 = vunpack.c.l.b16 %v566
      %v719 = vunpack.c.l.b16 %v567
      %v720 = vunpack.c.l.b16 %v568
      %v721 = vunpack.c.l.b16 %v569
      %v722 = vunpack.c.l.b16 %v570
      %v723 = vunpack.c.l.b16 %v571
      %v724 = vunpack.c.l.b16 %v572
      %v725 = vunpack.c.l.b16 %v573
      %v726 = vunpack.c.l.b16 %v574
      %v727 = vunpack.c.l.b16 %v575
      %v728 = vunpack.c.l.b16 %v576
      %v729 = vunpack.c.l.b16 %v577
      %v730 = vunpack.c.l.b16 %v578
      %v731 = vunpack.c.l.b16 %v579
      %v732 = vunpack.c.l.b16 %v580
      %v733 = vunpack.c.l.b16 %v581
      %v734 = vunpack.c.l.b16 %v582
      %v735 = vunpack.c.l.b16 %v583
      %v736 = vunpack.c.l.b16 %v584
      %v737 = vunpack.c.l.b16 %v585
      %v738 = vunpack.c.l.b16 %v586
      %v739 = vunpack.c.l.b16 %v587
      %v740 = vunpack.c.l.b16 %v588
      %v741 = vunpack.c.l.b16 %v589
      %v742 = vunpack.c.l.b16 %v590
      %v743 = vunpack.c.l.b16 %v591
      %v744 = vunpack.c.l.b16 %v592
      %v745 = vunpack.c.l.b16 %v593
      %v746 = vunpack.c.l.b16 %v594
      %v747 = vunpack.c.l.b16 %v595
      %v748 = vunpack.c.l.b16 %v596
      %v749 = vunpack.c.l.b16 %v597
      %v750 = vunpack.c.l.b16 %v598
      %v751 = vunpack.c.l.b16 %v599
      %v752 = vunpack.c.l.b16 %v600
      %v753 = vunpack.c.l.b16 %v601
      %v754 = vunpack.c.l.b16 %v602
      %v755 = vunpack.c.l.b16 %v603
      %v756 = vpack.c.b16 %v693, %v692
      %v757 = vpack.c.b16 %v695, %v694
      %v758 = vpack.c.b16 %v697, %v696
      %v759 = vpack.c.b16 %v699, %v698
      %v760 = vpack.c.b16 %v701, %v700
      %v761 = vpack.c.b16 %v703, %v702
      %v762 = vpack.c.b16 %v705, %v704
      %v763 = vpack.c.b16 %v707, %v706
      %v764 = vpack.c.b16 %v709, %v708
      %v765 = vpack.c.b16 %v711, %v710
      %v766 = vpack.c.b16 %v713, %v712
      %v767 = vpack.c.b16 %v715, %v714
      %v768 = vpack.c.b16 %v717, %v716
      %v769 = vpack.c.b16 %v719, %v718
      %v770 = vpack.c.b16 %v721, %v720
      %v771 = vpack.c.b16 %v723, %v722
      %v772 = vpack.c.b16 %v725, %v724
      %v773 = vpack.c.b16 %v727, %v726
      %v774 = vpack.c.b16 %v729, %v728
      %v775 = vpack.c.b16 %v731, %v730
      %v776 = vpack.c.b16 %v733, %v732
      %v777 = vpack.c.b16 %v735, %v734
      %v778 = vpack.c.b16 %v737, %v736
      %v779 = vpack.c.b16 %v739, %v738
      %v780 = vpack.c.b16 %v741, %v740
      %v781 = vpack.c.b16 %v743, %v742
      %v782 = vpack.c.b16 %v745, %v744
      %v783 = vpack.c.b16 %v747, %v746
      %v784 = vpack.c.b16 %v749, %v748
      %v785 = vpack.c.b16 %v751, %v750
      %v786 = vpack.c.b16 %v753, %v752
      %v787 = vpack.c.b16 %v755, %v754
      %820 = vmatpush.bf16.msra.mxu0 %v763
      %821 = vmatpush.bf16.msra.mxu0 %v762
      %822 = vmatpush.bf16.msra.mxu0 %v761
      %823 = vmatpush.bf16.msra.mxu0 %v760
      %824 = vmatpush.bf16.msra.mxu0 %v759
      %825 = vmatpush.bf16.msra.mxu0 %v758
      %826 = vmatpush.bf16.msra.mxu0 %v757
      %827 = vmatpush.bf16.msra.mxu0 %v756
      %828 = vmatmul.bf16.gmra.mxu0 %v620
      %v829 = vpop.f32.mrf.mxu0
      %v830 = vadd.f32 %v606, %v829
      %v831 = vpop.f32.mrf.mxu0
      %v832 = vadd.f32 %v606, %v831
      %833 = vdwg.mxu0
      %834 = vmatpush.bf16.msra.mxu0 %v771
      %835 = vmatpush.bf16.msra.mxu0 %v770
      %836 = vmatpush.bf16.msra.mxu0 %v769
      %837 = vmatpush.bf16.msra.mxu0 %v768
      %838 = vmatpush.bf16.msra.mxu0 %v767
      %839 = vmatpush.bf16.msra.mxu0 %v766
      %840 = vmatpush.bf16.msra.mxu0 %v765
      %841 = vmatpush.bf16.msra.mxu0 %v764
      %842 = vmatmul.bf16.gmra.mxu0 %v621
      %v843 = vpop.f32.mrf.mxu0
      %v844 = vadd.f32 %v830, %v843
      %v845 = vpop.f32.mrf.mxu0
      %v846 = vadd.f32 %v832, %v845
      %847 = vdwg.mxu0
      %848 = vmatpush.bf16.msra.mxu0 %v779
      %849 = vmatpush.bf16.msra.mxu0 %v778
      %850 = vmatpush.bf16.msra.mxu0 %v777
      %851 = vmatpush.bf16.msra.mxu0 %v776
      %852 = vmatpush.bf16.msra.mxu0 %v775
      %853 = vmatpush.bf16.msra.mxu0 %v774
      %854 = vmatpush.bf16.msra.mxu0 %v773
      %855 = vmatpush.bf16.msra.mxu0 %v772
      %856 = vmatmul.bf16.gmra.mxu0 %v622
      %v857 = vpop.f32.mrf.mxu0
      %v858 = vadd.f32 %v844, %v857
      %v859 = vpop.f32.mrf.mxu0
      %v860 = vadd.f32 %v846, %v859
      %861 = vdwg.mxu0
      %862 = vmatpush.bf16.msra.mxu0 %v787
      %863 = vmatpush.bf16.msra.mxu0 %v786
      %864 = vmatpush.bf16.msra.mxu0 %v785
      %865 = vmatpush.bf16.msra.mxu0 %v784
      %866 = vmatpush.bf16.msra.mxu0 %v783
      %867 = vmatpush.bf16.msra.mxu0 %v782
      %868 = vmatpush.bf16.msra.mxu0 %v781
      %869 = vmatpush.bf16.msra.mxu0 %v780
      %870 = vmatmul.bf16.gmra.mxu0 %v623
      %v871 = vpop.f32.mrf.mxu0
      %v872 = vadd.f32 %v858, %v871
      %v873 = vpop.f32.mrf.mxu0
      %v874 = vadd.f32 %v860, %v873
      %875 = vdwg.mxu0
      %v876 = vld [vmem:[%s506] sm:$0xf]
      %v877 = vld [vmem:[%s506 + $0x4] sm:$0xf]
      %v878 = vld [vmem:[%s506 + $0x8] sm:$0xf]
      %v879 = vld [vmem:[%s506 + $0xc] sm:$0xf]
      %v880 = vld [vmem:[%s509] sm:$0x1]
      %v882 = vperm.slane %v880, 0
      %v886 = vunpack.c.l.b16 %v534
      %v887 = vunpack.c.l.b16 %v535
      %v888 = vpack.c.b16 %v887, %v886
      %v893 = vunpack.c.l.b16 %v876
      %v894 = vunpack.c.l.b16 %v877
      %v895 = vunpack.c.l.b16 %v878
      %v896 = vunpack.c.l.b16 %v879
      %v897 = vpack.c.b16 %v894, %v893
      %v898 = vpack.c.b16 %v896, %v895
      %vm901 = vcmask 261120
      %v903 = vsel %vm901, %v888, 0
      %905 = vmatpush.bf16.msra.mxu0 0
      %906 = vmatpush.bf16.msra.mxu0 0
      %907 = vmatpush.bf16.msra.mxu0 0
      %908 = vmatpush.bf16.msra.mxu0 0
      %909 = vmatpush.bf16.msra.mxu0 0
      %910 = vmatpush.bf16.msra.mxu0 0
      %911 = vmatpush.bf16.msra.mxu0 %v898
      %912 = vmatpush.bf16.msra.mxu0 %v897
      %913 = vmatmul.bf16.gmra.mxu0 %v903
      %v914 = vpop.f32.mrf.mxu0
      %v915 = vadd.f32 %v882, %v914
      %v916 = vpop.f32.mrf.mxu0
      %v917 = vadd.f32 %v882, %v916
      %918 = vdwg.mxu0
      %v919 = vpack.c.bf16 %v915, %v915
      %v920 = vpack.c.bf16 %v917, %v917
      %v921 = vpack.c.bf16 %v872, %v872
      %v922 = vpack.c.bf16 %v874, %v874
      %v923 = vld [vmem:[%s514] sm:$0xf]
      %v924 = vld [vmem:[%s514 + $0x4] sm:$0xf]
      %v925 = vld [vmem:[%s514 + $0x8] sm:$0xf]
      %v926 = vld [vmem:[%s514 + $0xc] sm:$0xf]
      %v927 = vld [vmem:[%s522] sm:$0x1]
      %v929 = vperm.slane %v927, 0
      %v935 = vunpack.c.l.b16 %v923
      %v936 = vunpack.c.l.b16 %v924
      %v937 = vunpack.c.l.b16 %v925
      %v938 = vunpack.c.l.b16 %v926
      %v939 = vpack.c.b16 %v936, %v935
      %v940 = vpack.c.b16 %v938, %v937
      %943 = vmatpush.bf16.msra.mxu0 0
      %944 = vmatpush.bf16.msra.mxu0 0
      %945 = vmatpush.bf16.msra.mxu0 0
      %946 = vmatpush.bf16.msra.mxu0 0
      %947 = vmatpush.bf16.msra.mxu0 0
      %948 = vmatpush.bf16.msra.mxu0 0
      %949 = vmatpush.bf16.msra.mxu0 %v940
      %950 = vmatpush.bf16.msra.mxu0 %v939
      %951 = vmatmul.bf16.gmra.mxu0 %v903
      %v952 = vpop.f32.mrf.mxu0
      %v953 = vadd.f32 %v929, %v952
      %v954 = vpop.f32.mrf.mxu0
      %v955 = vadd.f32 %v929, %v954
      %956 = vdwg.mxu0
      %v957 = vld [vmem:[%s519] sm:$0xff]
      %v958 = vld [vmem:[%s519 + $0x8] sm:$0xff]
      %v959 = vld [vmem:[%s519 + $0x10] sm:$0xff]
      %v960 = vld [vmem:[%s519 + $0x18] sm:$0xff]
      %v963 = vunpack.c.l.b16 %v919
      %v964 = vunpack.c.l.b16 %v920
      %v965 = vpack.c.b16 %v964, %v963
      %v968 = vunpack.c.l.b16 %v921
      %v969 = vunpack.c.l.b16 %v922
      %v970 = vpack.c.b16 %v969, %v968
      %vm971 = vcmask 64512
      %v973 = vsel %vm971, %v965, 0
      %v976 = vsel %vm971, %v970, 0
      %978 = vmatpush.bf16.xpose.msra.mxu0 0
      %979 = vmatpush.bf16.xpose.msra.mxu0 0
      %980 = vmatpush.bf16.xpose.msra.mxu0 0
      %981 = vmatpush.bf16.xpose.msra.mxu0 0
      %982 = vmatpush.bf16.xpose.msra.mxu0 0
      %983 = vmatpush.bf16.xpose.msra.mxu0 0
      %984 = vmatpush.bf16.xpose.msra.mxu0 0
      %985 = vmatpush.bf16.xpose.msra.mxu0 %v976
      %986 = vmatmul.bf16.gmra.mxu0 %v973
      %v987 = vpop.f32.mrf.mxu0
      %v988 = vadd.f32 0.0, %v987
      %v989 = vpop.f32.mrf.mxu0
      %v990 = vadd.f32 0.0, %v989
      %991 = vdwg.mxu0
      %vm992 = vcmask 130048
      %v993 = vsel %vm992, %v988, -inf
      %994 = vmax.xlane.f32.xlu0 %v993
      %v995 = vpop.xlane.xlu0 %994
      %v996 = vsel %vm992, %v990, -inf
      %997 = vmax.xlane.f32.xlu0 %v996
      %v998 = vpop.xlane.xlu0 %997
      %v999 = vsub.f32 %v988, %v995
      %v1000 = vsub.f32 %v990, %v998
      %v1001 = vmul.f32 %v999, 1.442695
      %v1002 = vpow.pop %v1001
      %v1003 = vmul.f32 %v1000, 1.442695
      %v1004 = vpow.pop %v1003
      %v1005 = vsel %vm992, %v1002, 0.0
      %1006 = vadd.xlane.f32.xlu0 %v1005
      %v1007 = vpop.xlane.xlu0 %1006
      %v1008 = vsel %vm992, %v1004, 0.0
      %1009 = vadd.xlane.f32.xlu0 %v1008
      %v1010 = vpop.xlane.xlu0 %1009
      %v1011 = vrcp.pop %v1007
      %v1012 = vrcp.pop %v1010
      %v1013 = vmul.f32 %v1002, %v1011
      %v1014 = vmul.f32 %v1004, %v1012
      %v1015 = vpack.c.bf16 %v1013, %v1013
      %v1016 = vpack.c.bf16 %v1014, %v1014
      %v1019 = vunpack.c.l.b16 %v1015
      %v1020 = vunpack.c.l.b16 %v1016
      %v1021 = vpack.c.b16 %v1020, %v1019
      %1022 = vrot.lane.b32.xlu0 %v970, 96
      %v1023 = vpop.permute.xlu0 %1022
      %v1026 = vsel %vm992, %v1021, 0
      %1028 = vmatpush.bf16.msra.mxu0 0
      %1029 = vmatpush.bf16.msra.mxu0 0
      %1030 = vmatpush.bf16.msra.mxu0 0
      %1031 = vmatpush.bf16.msra.mxu0 0
      %1032 = vmatpush.bf16.msra.mxu0 0
      %1033 = vmatpush.bf16.msra.mxu0 0
      %1034 = vmatpush.bf16.msra.mxu0 0
      %1035 = vmatpush.bf16.msra.mxu0 %v1023
      %1036 = vmatmul.bf16.gmra.mxu0 %v1026
      %v1037 = vpop.f32.mrf.mxu0
      %v1038 = vadd.f32 0.0, %v1037
      %v1039 = vpop.f32.mrf.mxu0
      %v1040 = vadd.f32 0.0, %v1039
      %1041 = vdwg.mxu0
      %v1043 = vsel %vm971, %v1038, 0
      %v1046 = vsel %vm971, %v1040, 0
      %1048 = vmatpush.msra.mxu0 0.0
      %1049 = vmatpush.msra.mxu0 0.0
      %1050 = vmatpush.msra.mxu0 0.0
      %1051 = vmatpush.msra.mxu0 0.0
      %1052 = vmatpush.msra.mxu0 0.0
      %1053 = vmatpush.msra.mxu0 0.0
      %1054 = vmatpush.msra.mxu0 0.0
      %1055 = vmatpush.msra.mxu0 0.0
      %1056 = vmatpush.msra.mxu0 0.0
      %1057 = vmatpush.msra.mxu0 0.0
      %1058 = vmatpush.msra.mxu0 0.0
      %1059 = vmatpush.msra.mxu0 0.0
      %1060 = vmatpush.msra.mxu0 0.0
      %1061 = vmatpush.msra.mxu0 0.0
      %1062 = vmatpush.msra.mxu0 0.0
      %1063 = vmatpush.msra.mxu0 %v957
      %1064 = vmatmul.f32.gmra.mxu0 %v1043
      %v1065 = vpop.f32.mrf.mxu0
      %v1066 = vadd.f32 0.0, %v1065
      %1067 = vmatmul.f32.gmra.mxu0 %v1046
      %v1068 = vpop.f32.mrf.mxu0
      %v1069 = vadd.f32 0.0, %v1068
      %1070 = vdwg.mxu0
      %v1071 = vadd.f32 %v953, %v1066
      %v1072 = vadd.f32 %v955, %v1069
      %1073 = vrot.lane.b32.xlu0 %v965, 120
      %v1074 = vpop.permute.xlu0 %1073
      %1075 = vrot.lane.b32.xlu0 %v970, 120
      %v1076 = vpop.permute.xlu0 %1075
      %v1078 = vsel %vm971, %v1074, 0
      %v1081 = vsel %vm971, %v1076, 0
      %1083 = vmatpush.bf16.xpose.msra.mxu0 0
      %1084 = vmatpush.bf16.xpose.msra.mxu0 0
      %1085 = vmatpush.bf16.xpose.msra.mxu0 0
      %1086 = vmatpush.bf16.xpose.msra.mxu0 0
      %1087 = vmatpush.bf16.xpose.msra.mxu0 0
      %1088 = vmatpush.bf16.xpose.msra.mxu0 0
      %1089 = vmatpush.bf16.xpose.msra.mxu0 0
      %1090 = vmatpush.bf16.xpose.msra.mxu0 %v1081
      %1091 = vmatmul.bf16.gmra.mxu0 %v1078
      %v1092 = vpop.f32.mrf.mxu0
      %v1093 = vadd.f32 0.0, %v1092
      %v1094 = vpop.f32.mrf.mxu0
      %v1095 = vadd.f32 0.0, %v1094
      %1096 = vdwg.mxu0
      %v1097 = vsel %vm992, %v1093, -inf
      %1098 = vmax.xlane.f32.xlu0 %v1097
      %v1099 = vpop.xlane.xlu0 %1098
      %v1100 = vsel %vm992, %v1095, -inf
      %1101 = vmax.xlane.f32.xlu0 %v1100
      %v1102 = vpop.xlane.xlu0 %1101
      %v1103 = vsub.f32 %v1093, %v1099
      %v1104 = vsub.f32 %v1095, %v1102
      %v1105 = vmul.f32 %v1103, 1.442695
      %v1106 = vpow.pop %v1105
      %v1107 = vmul.f32 %v1104, 1.442695
      %v1108 = vpow.pop %v1107
      %v1109 = vsel %vm992, %v1106, 0.0
      %1110 = vadd.xlane.f32.xlu0 %v1109
      %v1111 = vpop.xlane.xlu0 %1110
      %v1112 = vsel %vm992, %v1108, 0.0
      %1113 = vadd.xlane.f32.xlu0 %v1112
      %v1114 = vpop.xlane.xlu0 %1113
      %v1115 = vrcp.pop %v1111
      %v1116 = vrcp.pop %v1114
      %v1117 = vmul.f32 %v1106, %v1115
      %v1118 = vmul.f32 %v1108, %v1116
      %v1119 = vpack.c.bf16 %v1117, %v1117
      %v1120 = vpack.c.bf16 %v1118, %v1118
      %v1123 = vunpack.c.l.b16 %v1119
      %v1124 = vunpack.c.l.b16 %v1120
      %v1125 = vpack.c.b16 %v1124, %v1123
      %1126 = vrot.lane.b32.xlu0 %v970, 88
      %v1127 = vpop.permute.xlu0 %1126
      %v1130 = vsel %vm992, %v1125, 0
      %1132 = vmatpush.bf16.msra.mxu0 0
      %1133 = vmatpush.bf16.msra.mxu0 0
      %1134 = vmatpush.bf16.msra.mxu0 0
      %1135 = vmatpush.bf16.msra.mxu0 0
      %1136 = vmatpush.bf16.msra.mxu0 0
      %1137 = vmatpush.bf16.msra.mxu0 0
      %1138 = vmatpush.bf16.msra.mxu0 0
      %1139 = vmatpush.bf16.msra.mxu0 %v1127
      %1140 = vmatmul.bf16.gmra.mxu0 %v1130
      %v1141 = vpop.f32.mrf.mxu0
      %v1142 = vadd.f32 0.0, %v1141
      %v1143 = vpop.f32.mrf.mxu0
      %v1144 = vadd.f32 0.0, %v1143
      %1145 = vdwg.mxu0
      %v1147 = vsel %vm971, %v1142, 0
      %v1150 = vsel %vm971, %v1144, 0
      %1152 = vmatpush.msra.mxu0 0.0
      %1153 = vmatpush.msra.mxu0 0.0
      %1154 = vmatpush.msra.mxu0 0.0
      %1155 = vmatpush.msra.mxu0 0.0
      %1156 = vmatpush.msra.mxu0 0.0
      %1157 = vmatpush.msra.mxu0 0.0
      %1158 = vmatpush.msra.mxu0 0.0
      %1159 = vmatpush.msra.mxu0 0.0
      %1160 = vmatpush.msra.mxu0 0.0
      %1161 = vmatpush.msra.mxu0 0.0
      %1162 = vmatpush.msra.mxu0 0.0
      %1163 = vmatpush.msra.mxu0 0.0
      %1164 = vmatpush.msra.mxu0 0.0
      %1165 = vmatpush.msra.mxu0 0.0
      %1166 = vmatpush.msra.mxu0 0.0
      %1167 = vmatpush.msra.mxu0 %v958
      %1168 = vmatmul.f32.gmra.mxu0 %v1147
      %v1169 = vpop.f32.mrf.mxu0
      %v1170 = vadd.f32 0.0, %v1169
      %1171 = vmatmul.f32.gmra.mxu0 %v1150
      %v1172 = vpop.f32.mrf.mxu0
      %v1173 = vadd.f32 0.0, %v1172
      %1174 = vdwg.mxu0
      %v1175 = vadd.f32 %v1071, %v1170
      %v1176 = vadd.f32 %v1072, %v1173
      %1177 = vrot.lane.b32.xlu0 %v965, 112
      %v1178 = vpop.permute.xlu0 %1177
      %1179 = vrot.lane.b32.xlu0 %v970, 112
      %v1180 = vpop.permute.xlu0 %1179
      %v1182 = vsel %vm971, %v1178, 0
      %v1185 = vsel %vm971, %v1180, 0
      %1187 = vmatpush.bf16.xpose.msra.mxu0 0
      %1188 = vmatpush.bf16.xpose.msra.mxu0 0
      %1189 = vmatpush.bf16.xpose.msra.mxu0 0
      %1190 = vmatpush.bf16.xpose.msra.mxu0 0
      %1191 = vmatpush.bf16.xpose.msra.mxu0 0
      %1192 = vmatpush.bf16.xpose.msra.mxu0 0
      %1193 = vmatpush.bf16.xpose.msra.mxu0 0
      %1194 = vmatpush.bf16.xpose.msra.mxu0 %v1185
      %1195 = vmatmul.bf16.gmra.mxu0 %v1182
      %v1196 = vpop.f32.mrf.mxu0
      %v1197 = vadd.f32 0.0, %v1196
      %v1198 = vpop.f32.mrf.mxu0
      %v1199 = vadd.f32 0.0, %v1198
      %1200 = vdwg.mxu0
      %v1201 = vsel %vm992, %v1197, -inf
      %1202 = vmax.xlane.f32.xlu0 %v1201
      %v1203 = vpop.xlane.xlu0 %1202
      %v1204 = vsel %vm992, %v1199, -inf
      %1205 = vmax.xlane.f32.xlu0 %v1204
      %v1206 = vpop.xlane.xlu0 %1205
      %v1207 = vsub.f32 %v1197, %v1203
      %v1208 = vsub.f32 %v1199, %v1206
      %v1209 = vmul.f32 %v1207, 1.442695
      %v1210 = vpow.pop %v1209
      %v1211 = vmul.f32 %v1208, 1.442695
      %v1212 = vpow.pop %v1211
      %v1213 = vsel %vm992, %v1210, 0.0
      %1214 = vadd.xlane.f32.xlu0 %v1213
      %v1215 = vpop.xlane.xlu0 %1214
      %v1216 = vsel %vm992, %v1212, 0.0
      %1217 = vadd.xlane.f32.xlu0 %v1216
      %v1218 = vpop.xlane.xlu0 %1217
      %v1219 = vrcp.pop %v1215
      %v1220 = vrcp.pop %v1218
      %v1221 = vmul.f32 %v1210, %v1219
      %v1222 = vmul.f32 %v1212, %v1220
      %v1223 = vpack.c.bf16 %v1221, %v1221
      %v1224 = vpack.c.bf16 %v1222, %v1222
      %v1227 = vunpack.c.l.b16 %v1223
      %v1228 = vunpack.c.l.b16 %v1224
      %v1229 = vpack.c.b16 %v1228, %v1227
      %1230 = vrot.lane.b32.xlu0 %v970, 80
      %v1231 = vpop.permute.xlu0 %1230
      %v1234 = vsel %vm992, %v1229, 0
      %1236 = vmatpush.bf16.msra.mxu0 0
      %1237 = vmatpush.bf16.msra.mxu0 0
      %1238 = vmatpush.bf16.msra.mxu0 0
      %1239 = vmatpush.bf16.msra.mxu0 0
      %1240 = vmatpush.bf16.msra.mxu0 0
      %1241 = vmatpush.bf16.msra.mxu0 0
      %1242 = vmatpush.bf16.msra.mxu0 0
      %1243 = vmatpush.bf16.msra.mxu0 %v1231
      %1244 = vmatmul.bf16.gmra.mxu0 %v1234
      %v1245 = vpop.f32.mrf.mxu0
      %v1246 = vadd.f32 0.0, %v1245
      %v1247 = vpop.f32.mrf.mxu0
      %v1248 = vadd.f32 0.0, %v1247
      %1249 = vdwg.mxu0
      %v1251 = vsel %vm971, %v1246, 0
      %v1254 = vsel %vm971, %v1248, 0
      %1256 = vmatpush.msra.mxu0 0.0
      %1257 = vmatpush.msra.mxu0 0.0
      %1258 = vmatpush.msra.mxu0 0.0
      %1259 = vmatpush.msra.mxu0 0.0
      %1260 = vmatpush.msra.mxu0 0.0
      %1261 = vmatpush.msra.mxu0 0.0
      %1262 = vmatpush.msra.mxu0 0.0
      %1263 = vmatpush.msra.mxu0 0.0
      %1264 = vmatpush.msra.mxu0 0.0
      %1265 = vmatpush.msra.mxu0 0.0
      %1266 = vmatpush.msra.mxu0 0.0
      %1267 = vmatpush.msra.mxu0 0.0
      %1268 = vmatpush.msra.mxu0 0.0
      %1269 = vmatpush.msra.mxu0 0.0
      %1270 = vmatpush.msra.mxu0 0.0
      %1271 = vmatpush.msra.mxu0 %v959
      %1272 = vmatmul.f32.gmra.mxu0 %v1251
      %v1273 = vpop.f32.mrf.mxu0
      %v1274 = vadd.f32 0.0, %v1273
      %1275 = vmatmul.f32.gmra.mxu0 %v1254
      %v1276 = vpop.f32.mrf.mxu0
      %v1277 = vadd.f32 0.0, %v1276
      %1278 = vdwg.mxu0
      %v1279 = vadd.f32 %v1175, %v1274
      %v1280 = vadd.f32 %v1176, %v1277
      %1281 = vrot.lane.b32.xlu0 %v965, 104
      %v1282 = vpop.permute.xlu0 %1281
      %1283 = vrot.lane.b32.xlu0 %v970, 104
      %v1284 = vpop.permute.xlu0 %1283
      %v1286 = vsel %vm971, %v1282, 0
      %v1289 = vsel %vm971, %v1284, 0
      %1291 = vmatpush.bf16.xpose.msra.mxu0 0
      %1292 = vmatpush.bf16.xpose.msra.mxu0 0
      %1293 = vmatpush.bf16.xpose.msra.mxu0 0
      %1294 = vmatpush.bf16.xpose.msra.mxu0 0
      %1295 = vmatpush.bf16.xpose.msra.mxu0 0
      %1296 = vmatpush.bf16.xpose.msra.mxu0 0
      %1297 = vmatpush.bf16.xpose.msra.mxu0 0
      %1298 = vmatpush.bf16.xpose.msra.mxu0 %v1289
      %1299 = vmatmul.bf16.gmra.mxu0 %v1286
      %v1300 = vpop.f32.mrf.mxu0
      %v1301 = vadd.f32 0.0, %v1300
      %v1302 = vpop.f32.mrf.mxu0
      %v1303 = vadd.f32 0.0, %v1302
      %1304 = vdwg.mxu0
      %v1305 = vsel %vm992, %v1301, -inf
      %1306 = vmax.xlane.f32.xlu0 %v1305
      %v1307 = vpop.xlane.xlu0 %1306
      %v1308 = vsel %vm992, %v1303, -inf
      %1309 = vmax.xlane.f32.xlu0 %v1308
      %v1310 = vpop.xlane.xlu0 %1309
      %v1311 = vsub.f32 %v1301, %v1307
      %v1312 = vsub.f32 %v1303, %v1310
      %v1313 = vmul.f32 %v1311, 1.442695
      %v1314 = vpow.pop %v1313
      %v1315 = vmul.f32 %v1312, 1.442695
      %v1316 = vpow.pop %v1315
      %v1317 = vsel %vm992, %v1314, 0.0
      %1318 = vadd.xlane.f32.xlu0 %v1317
      %v1319 = vpop.xlane.xlu0 %1318
      %v1320 = vsel %vm992, %v1316, 0.0
      %1321 = vadd.xlane.f32.xlu0 %v1320
      %v1322 = vpop.xlane.xlu0 %1321
      %v1323 = vrcp.pop %v1319
      %v1324 = vrcp.pop %v1322
      %v1325 = vmul.f32 %v1314, %v1323
      %v1326 = vmul.f32 %v1316, %v1324
      %v1327 = vpack.c.bf16 %v1325, %v1325
      %v1328 = vpack.c.bf16 %v1326, %v1326
      %v1331 = vunpack.c.l.b16 %v1327
      %v1332 = vunpack.c.l.b16 %v1328
      %v1333 = vpack.c.b16 %v1332, %v1331
      %1334 = vrot.lane.b32.xlu0 %v970, 72
      %v1335 = vpop.permute.xlu0 %1334
      %v1338 = vsel %vm992, %v1333, 0
      %1340 = vmatpush.bf16.msra.mxu0 0
      %1341 = vmatpush.bf16.msra.mxu0 0
      %1342 = vmatpush.bf16.msra.mxu0 0
      %1343 = vmatpush.bf16.msra.mxu0 0
      %1344 = vmatpush.bf16.msra.mxu0 0
      %1345 = vmatpush.bf16.msra.mxu0 0
      %1346 = vmatpush.bf16.msra.mxu0 0
      %1347 = vmatpush.bf16.msra.mxu0 %v1335
      %1348 = vmatmul.bf16.gmra.mxu0 %v1338
      %v1349 = vpop.f32.mrf.mxu0
      %v1350 = vadd.f32 0.0, %v1349
      %v1351 = vpop.f32.mrf.mxu0
      %v1352 = vadd.f32 0.0, %v1351
      %1353 = vdwg.mxu0
      %v1355 = vsel %vm971, %v1350, 0
      %v1358 = vsel %vm971, %v1352, 0
      %1360 = vmatpush.msra.mxu0 0.0
      %1361 = vmatpush.msra.mxu0 0.0
      %1362 = vmatpush.msra.mxu0 0.0
      %1363 = vmatpush.msra.mxu0 0.0
      %1364 = vmatpush.msra.mxu0 0.0
      %1365 = vmatpush.msra.mxu0 0.0
      %1366 = vmatpush.msra.mxu0 0.0
      %1367 = vmatpush.msra.mxu0 0.0
      %1368 = vmatpush.msra.mxu0 0.0
      %1369 = vmatpush.msra.mxu0 0.0
      %1370 = vmatpush.msra.mxu0 0.0
      %1371 = vmatpush.msra.mxu0 0.0
      %1372 = vmatpush.msra.mxu0 0.0
      %1373 = vmatpush.msra.mxu0 0.0
      %1374 = vmatpush.msra.mxu0 0.0
      %1375 = vmatpush.msra.mxu0 %v960
      %1376 = vmatmul.f32.gmra.mxu0 %v1355
      %v1377 = vpop.f32.mrf.mxu0
      %v1378 = vadd.f32 0.0, %v1377
      %1379 = vmatmul.f32.gmra.mxu0 %v1358
      %v1380 = vpop.f32.mrf.mxu0
      %v1381 = vadd.f32 0.0, %v1380
      %1382 = vdwg.mxu0
      %v1383 = vadd.f32 %v1279, %v1378
      %v1384 = vadd.f32 %v1280, %v1381
      %1385 = vst.msk [vmem:[%s531] sm:$0xff] %vm901, %v1383
      %1386 = vst.msk [vmem:[%s531 + $0x8] sm:$0xff] %vm901, %v1384
      %s1387 = smul.u32 2, %s25
      %p1388 = scmp.lt.s32.totalorder %s24, 1
      %s1389 = scalar_select %p1388, %s24, 1
      %p1390 = scmp.lt.s32.totalorder %s1387, 3
      %s1391 = scalar_select %p1390, %s1387, 3
      %s1392 = smul.addr %s1389, 4
      %s1393 = sadd.s32 %s1391, %s1392
      %s1394 = smul.addr %s1393, 8
      %s1395 = scalar_lea.vmem %s9, %s1394
      // Predicated region
      $region57: #{_forward_impl.1} parent=55 // pred_check
        %p1396 = pneg %p290
      $region58: #{_forward_impl.1} parent=55 // pred_check_branch
        %1398 = sbr.rel (%p1396) target = $region60
      $region59: #{_forward_impl.1} parent=55 // pred_region
        %s1399 = smul.u32 2, %s25
      $region60: #{_forward_impl.1} parent=55 // pred_fallthru
        _
    $region56: #{_forward_impl.1} parent=5 // pred_fallthru
      _
    %p1400 = scmp.le.s32.totalorder 2, %s15
    // Predicated region
    $region61: #{_forward_impl.1} parent=5 // pred_check
      %p1401 = pneg %p1400
    $region62: #{_forward_impl.1} parent=5 // pred_check_branch
      %1403 = sbr.rel (%p1401) target = $region64
    $region63: #{_forward_impl.1} parent=5 // pred_region
      %s1404 = ssub.s32 %s15, 2
      // Predicated region
      $region65: #{_forward_impl.1} parent=63 // pred_check
        %p1405 = pneg %p296
      $region66: #{_forward_impl.1} parent=63 // pred_check_branch
        %1407 = sbr.rel (%p1405) target = $region68
      $region67: #{_forward_impl.1} parent=63 // pred_region
        %s1408 = smul.u32 2, %s27
        %p1409 = scmp.lt.s32.totalorder %s26, 1
        %s1410 = scalar_select %p1409, %s26, 1
        %p1411 = scmp.lt.s32.totalorder %s1408, 3
        %s1412 = scalar_select %p1411, %s1408, 3
        %s1413 = smul.addr %s1410, 4
        %s1414 = sadd.s32 %s1412, %s1413
        %s1415 = smul.addr %s1414, 8
        %s1416 = scalar_lea.vmem %s9, %s1415
      $region68: #{_forward_impl.1} parent=63 // pred_fallthru
        _
    $region64: #{_forward_impl.1} parent=5 // pred_fallthru
      _
  $region6: #{_forward_impl.1} parent=0 // loop_footer
    %s19 = sadd.s32 1, %s15
  $region7: #{_forward_impl.1} parent=0 // loop_footer_branch
    %14 = sbr.rel target = $region3
  $region8: #{_forward_impl.1} parent=0 // loop_exit
    _

</llo_original>
